<compile_context>
chip_gen: v7x
topology: tpu7x:2x2x1
jax: 0.10.0
libtpu: 0.0.40
codegen_flags: <defaults>
</compile_context>

<pallas_src>
from functools import partial

import numpy as np
import jax
import jax.numpy as jnp
from jax.experimental import pallas as pl
from jax.experimental.pallas import tpu as pltpu

BN_EPS = 1e-5
NEG_SLOPE = 0.2


def _hi_lo(v):
    """Split f32 -> (hi, lo) bf16 parts with hi + lo ~ v (~16 mantissa bits)."""
    hi = v.astype(jnp.bfloat16)
    lo = (v - hi.astype(jnp.float32)).astype(jnp.bfloat16)
    return hi, lo


def encoder_kernel(x_ref, ea_ref, src_ref, dst_ref, dstt_ref,
                   wn_ref, bnb_ref, we_ref, beb_ref,
                   g1_ref, bt1_ref, ge_ref, bte_ref,
                   wfc_ref, bfc_ref, wat_ref, bat_ref,
                   out_ref, *, conv_layers, hidden_node_dim, hidden_edge_dim):
    H, He = hidden_node_dim, hidden_edge_dim
    f32 = jnp.float32

    def batchnorm_train(v, gamma, beta):
        # PyTorch BatchNorm1d in training mode: batch mean / biased variance.
        mean = jnp.mean(v, axis=0, keepdims=True)
        var = jnp.mean((v - mean) ** 2, axis=0, keepdims=True)
        return (v - mean) * jax.lax.rsqrt(var + BN_EPS) * gamma + beta

    # fc_node + bn1
    x = jnp.dot(x_ref[...], wn_ref[...], preferred_element_type=f32) + bnb_ref[...]
    x = batchnorm_train(x, g1_ref[...], bt1_ref[...])

    # fc_edge + be
    e = jnp.dot(ea_ref[...], we_ref[...], preferred_element_type=f32) + beb_ref[...]
    e = batchnorm_train(e, ge_ref[...], bte_ref[...])

    # bf16 one-hot operators consumed directly: no f32 cast copies and no
    # in-kernel transpose (the scatter operator arrives pre-transposed).
    src = src_ref[...]      # (E, N) bf16 : gathers source-node rows   (x_j)
    dst = dst_ref[...]      # (E, N) bf16 : gathers destination rows   (x_i)
    dst_t = dstt_ref[...]   # (N, E) bf16 : scatter-add back to destinations

    # Layer-invariant edge projection hoisted out of the loop: one
    # (E, He) x (He, L*H) matmul instead of L tiny K=He matmuls.
    w_e_all = jnp.concatenate(
        [wat_ref[l, 2 * H:2 * H + He, :] for l in range(conv_layers)], axis=-1)
    e_att_all = jnp.dot(e, w_e_all, preferred_element_type=f32)        # (E, L*H)

    for l in range(conv_layers):     # static Python loop; conv_layers is small
        w_i = wat_ref[l, 0:H, :]
        w_j = wat_ref[l, H:2 * H, :]

        xf = jnp.dot(x, wfc_ref[l], preferred_element_type=f32) + bfc_ref[l]   # (N, H)

        # Fold both attention projections to node level (w_i gathered through
        # dst, w_j gathered through src) so per-edge work is purely gathers.
        xw_i = jnp.dot(xf, w_i, preferred_element_type=f32)                    # (N, H)
        xw_j = jnp.dot(xf, w_j, preferred_element_type=f32)                    # (N, H)

        # ---- gathers: bf16 one-hots x lane-packed bf16x2 node features -----
        xf_hi, xf_lo = _hi_lo(xf)
        xwj_hi, xwj_lo = _hi_lo(xw_j)
        xwi_hi, xwi_lo = _hi_lo(xw_i)

        gs = jnp.concatenate([xf_hi, xf_lo, xwj_hi, xwj_lo], axis=-1)          # (N, 4H) bf16
        gd = jnp.concatenate([xwi_hi, xwi_lo], axis=-1)                        # (N, 2H) bf16

        g_src = jnp.dot(src, gs, preferred_element_type=f32)                   # (E, 4H)
        x_j = g_src[:, 0:H] + g_src[:, H:2 * H]                                # xf[src]
        att_j = g_src[:, 2 * H:3 * H] + g_src[:, 3 * H:4 * H]                  # (xf@w_j)[src]

        g_dst = jnp.dot(dst, gd, preferred_element_type=f32)                   # (E, 2H)
        att_i = g_dst[:, 0:H] + g_dst[:, H:2 * H]                              # (xf@w_i)[dst]

        logits = att_i + att_j + e_att_all[:, l * H:(l + 1) * H] + bat_ref[l]
        alpha = jnp.where(logits > 0, logits, NEG_SLOPE * logits)   # leaky_relu(0.2)

        # Segment softmax over edges grouped by destination node, per channel.
        # A global per-channel max is constant within every segment, so the
        # resulting softmax equals the reference's segment-max version.
        # TODO(synk): for production logit ranges a true per-segment max is
        # more robust (a segment far below the global max underflows to 0).
        alpha = alpha - jnp.max(alpha, axis=0, keepdims=True)
        p = jnp.exp(alpha)                                                     # (E, H)
        m = x_j * p                                                            # (E, H)

        # ---- scatter-add: single dst^T contraction, lane-dense (4H) RHS -----
        # denom is constant within each dst group, so normalization commutes
        # with the scatter-add and is applied at node level.
        p_hi, p_lo = _hi_lo(p)
        m_hi, m_lo = _hi_lo(m)
        sc_rhs = jnp.concatenate([p_hi, p_lo, m_hi, m_lo], axis=-1)            # (E, 4H) bf16
        sc = jnp.dot(dst_t, sc_rhs, preferred_element_type=f32)                # (N, 4H)
        denom = sc[:, 0:H] + sc[:, H:2 * H] + 1e-16
        num = sc[:, 2 * H:3 * H] + sc[:, 3 * H:4 * H]

        # EUP approximate reciprocal + one Newton step (back to ~f32 exact).
        r = pl.reciprocal(denom, approx=True)
        r = r * (2.0 - denom * r)

        x = x + num * r                       # residual; dropout p=0 -> no-op
        # bn2 ModuleList is created but never applied in the reference forward.

    out_ref[...] = x


def encoder_forward(params, x, edge_attr, edge_index, batch_size):
    N = x.shape[0]
    H = params['w_node'].shape[1]
    He = params['w_edge'].shape[1]
    L = params['w_fc'].shape[0]
    E = edge_index.shape[1]

    # One-hot gather/scatter operators in bf16 (0/1 values are exact).  The
    # scatter operator is built pre-transposed (N, E) so the kernel never
    # materializes an in-kernel transpose of an (E, N) operand.
    src_oh = jax.nn.one_hot(edge_index[0], N, dtype=jnp.bfloat16)            # (E, N)
    dst_oh = jax.nn.one_hot(edge_index[1], N, dtype=jnp.bfloat16)            # (E, N)
    dstt_oh = jax.nn.one_hot(edge_index[1], N, dtype=jnp.bfloat16, axis=0)   # (N, E)

    kernel = partial(encoder_kernel, conv_layers=L,
                     hidden_node_dim=H, hidden_edge_dim=He)
    vspec = pl.BlockSpec(memory_space=pltpu.MemorySpace.VMEM)

    args = (x, edge_attr, src_oh, dst_oh, dstt_oh,
            params['w_node'], params['b_node'], params['w_edge'], params['b_edge'],
            params['g1'], params['bt1'], params['ge'], params['bte'],
            params['w_fc'], params['b_fc'], params['w_attn'], params['b_attn'])

    # Advisory cost estimate (dominated by the (E,N)-operand gathers/scatter).
    flops = 2 * (N * x.shape[1] * H + E * edge_attr.shape[1] * He)
    flops += 2 * E * He * L * H                          # hoisted edge projection
    flops += L * (2 * E * N * (4 * H + 2 * H + 4 * H)    # src/dst gathers + scatter
                  + 2 * 3 * N * H * H)                   # xf, xw_i, xw_j
    bytes_accessed = sum(int(np.prod(a.shape)) * a.dtype.itemsize for a in args)
    bytes_accessed += N * H * 4  # output
    cost = pl.CostEstimate(flops=int(flops),
                           transcendentals=int(L * E * H),
                           bytes_accessed=int(bytes_accessed))

    # VMEM budget: residents (inputs + output + per-layer intermediates; no
    # double-buffering at grid=()) with headroom, clamped to ~85% of the
    # physical per-core VMEM reported by the runtime.
    try:
        phys_vmem = int(pltpu.get_tpu_info().vmem_capacity_bytes)
    except Exception:
        phys_vmem = 64 * 1024 * 1024
    intermediates = 4 * (16 * E * H + 16 * N * H + E * L * H)
    resident = bytes_accessed + intermediates
    vmem_limit = int(min(int(0.85 * phys_vmem),
                         max(16 * 1024 * 1024, 2 * resident)))
    # TODO(synk): for graphs where the (E,N)/(N,E) one-hots no longer fit in a
    # single VMEM block, tile the edge axis with a grid (scatter-add into VMEM
    # scratch with pl.when init/finalize) or switch to an index-based row
    # gather via PrefetchScalarGridSpec; that also restores DMA pipelining and
    # unlocks v7x's second TensorCore (core_map / "parallel" grid axis).

    out = pl.pallas_call(
        kernel,
        out_shape=jax.ShapeDtypeStruct((N, H), jnp.float32),
        in_specs=[vspec] * len(args),
        out_specs=vspec,
        compiler_params=pltpu.CompilerParams(vmem_limit_bytes=vmem_limit),
        cost_estimate=cost,
    )(*args)
    return out.reshape(batch_size, -1, H)


def encoder_ref(params, x, edge_attr, edge_index, batch_size):
    """Pure-JAX reference (mirrors the PyTorch forward) for correctness check."""
    def bn(v, g, b):
        m = v.mean(0, keepdims=True)
        var = ((v - m) ** 2).mean(0, keepdims=True)
        return (v - m) / jnp.sqrt(var + BN_EPS) * g + b

    x = x @ params['w_node'] + params['b_node']
    x = bn(x, params['g1'], params['bt1'])
    e = edge_attr @ params['w_edge'] + params['b_edge']
    e = bn(e, params['ge'], params['bte'])
    src, dst = edge_index[0], edge_index[1]
    N, H = x.shape
    for l in range(params['w_fc'].shape[0]):
        xf = x @ params['w_fc'][l] + params['b_fc'][l]
        x_i, x_j = xf[dst], xf[src]
        cat = jnp.concatenate([x_i, x_j, e], axis=-1)
        logits = cat @ params['w_attn'][l] + params['b_attn'][l]
        a = jnp.where(logits > 0, logits, NEG_SLOPE * logits)
        a = a - jax.ops.segment_max(a, dst, N)[dst]
        ea = jnp.exp(a)
        denom = jax.ops.segment_sum(ea, dst, N)[dst] + 1e-16
        aggr = jax.ops.segment_sum(x_j * (ea / denom), dst, N)
        x = x + aggr
    return x.reshape(batch_size, -1, H)


if __name__ == "__main__":
    batch_size = 2
    n_per_graph = 8
    N = batch_size * n_per_graph
    input_node_dim, hidden_node_dim = 3, 32
    input_edge_dim, hidden_edge_dim = 2, 16
    conv_layers = 3

    # Deterministic edge structure: each node connects to the next 2 nodes in
    # its own graph (so every destination has 2 incoming edges for softmax).
    srcs, dsts = [], []
    for g in range(batch_size):
        for i in range(n_per_graph):
            for k in (1, 2):
                srcs.append(g * n_per_graph + i)
                dsts.append(g * n_per_graph + (i + k) % n_per_graph)
    edge_index = jnp.array([srcs, dsts], dtype=jnp.int32)  # (2, E)
    E = edge_index.shape[1]

    key = jax.random.PRNGKey(0)
    keys = jax.random.split(key, 10)
    x = jax.random.normal(keys[0], (N, input_node_dim), jnp.float32)
    edge_attr = jax.random.normal(keys[1], (E, input_edge_dim), jnp.float32)

    def lin_init(k, din, dout):
        k1, k2 = jax.random.split(k)
        bound = 1.0 / np.sqrt(din)
        w = jax.random.uniform(k1, (din, dout), jnp.float32, -bound, bound)
        b = jax.random.uniform(k2, (1, dout), jnp.float32, -bound, bound)
        return w, b

    w_node, b_node = lin_init(keys[2], input_node_dim, hidden_node_dim)
    w_edge, b_edge = lin_init(keys[3], input_edge_dim, hidden_edge_dim)
    fc_ws, fc_bs, at_ws, at_bs = [], [], [], []
    for l in range(conv_layers):
        kfc, kat = jax.random.split(keys[4 + l])
        wf, bf = lin_init(kfc, hidden_node_dim, hidden_node_dim)
        wa, ba = lin_init(kat, 2 * hidden_node_dim + hidden_edge_dim, hidden_node_dim)
        fc_ws.append(wf); fc_bs.append(bf); at_ws.append(wa); at_bs.append(ba)

    params = dict(
        w_node=w_node, b_node=b_node, w_edge=w_edge, b_edge=b_edge,
        g1=jnp.ones((1, hidden_node_dim), jnp.float32),
        bt1=jnp.zeros((1, hidden_node_dim), jnp.float32),
        ge=jnp.ones((1, hidden_edge_dim), jnp.float32),
        bte=jnp.zeros((1, hidden_edge_dim), jnp.float32),
        w_fc=jnp.stack(fc_ws), b_fc=jnp.stack(fc_bs),
        w_attn=jnp.stack(at_ws), b_attn=jnp.stack(at_bs),
    )

    out = encoder_forward(params, x, edge_attr, edge_index, batch_size)
    out = jax.block_until_ready(out)
    assert out.shape == (batch_size, n_per_graph, hidden_node_dim)

    ref = encoder_ref(params, x, edge_attr, edge_index, batch_size)
    np.testing.assert_allclose(np.asarray(out), np.asarray(ref), rtol=1e-4, atol=1e-4)
    print("KERNEL_OK")
</pallas_src>

<mosaic_0001>
module attributes {stable_mosaic.version = 11 : i64} {
  func.func @encoder_kernel(%arg0: memref<16x3xf32, #tpu.memory_space<vmem>>, %arg1: memref<32x2xf32, #tpu.memory_space<vmem>>, %arg2: memref<32x16xbf16, #tpu.memory_space<vmem>>, %arg3: memref<32x16xbf16, #tpu.memory_space<vmem>>, %arg4: memref<16x32xbf16, #tpu.memory_space<vmem>>, %arg5: memref<3x32xf32, #tpu.memory_space<vmem>>, %arg6: memref<1x32xf32, #tpu.memory_space<vmem>>, %arg7: memref<2x16xf32, #tpu.memory_space<vmem>>, %arg8: memref<1x16xf32, #tpu.memory_space<vmem>>, %arg9: memref<1x32xf32, #tpu.memory_space<vmem>>, %arg10: memref<1x32xf32, #tpu.memory_space<vmem>>, %arg11: memref<1x16xf32, #tpu.memory_space<vmem>>, %arg12: memref<1x16xf32, #tpu.memory_space<vmem>>, %arg13: memref<3x32x32xf32, #tpu.memory_space<vmem>>, %arg14: memref<3x1x32xf32, #tpu.memory_space<vmem>>, %arg15: memref<3x80x32xf32, #tpu.memory_space<vmem>>, %arg16: memref<3x1x32xf32, #tpu.memory_space<vmem>>, %arg17: memref<16x32xf32, #tpu.memory_space<vmem>>) attributes {dimension_semantics = [], scalar_prefetch = 0 : i64, scratch_operands = 0 : i64, tpu.core_type = #tpu.core_type<tc>} {
    %c0 = arith.constant 0 : index
    %c0_0 = arith.constant 0 : index
    %0 = vector.load %arg0[%c0, %c0_0] : memref<16x3xf32, #tpu.memory_space<vmem>>, vector<16x3xf32>
    %c0_1 = arith.constant 0 : index
    %c0_2 = arith.constant 0 : index
    %1 = vector.load %arg5[%c0_1, %c0_2] : memref<3x32xf32, #tpu.memory_space<vmem>>, vector<3x32xf32>
    %cst = arith.constant dense<0.000000e+00> : vector<16x32xf32>
    %2 = tpu.matmul %0, %1, %cst {dimension_numbers = #tpu.dot_dimension_numbers<[1], [0], [0], [1], [0, 0, 1, 1], [], []>} : vector<16x3xf32>, vector<3x32xf32>, vector<16x32xf32> -> vector<16x32xf32>
    %c0_3 = arith.constant 0 : index
    %c0_4 = arith.constant 0 : index
    %3 = vector.load %arg6[%c0_3, %c0_4] : memref<1x32xf32, #tpu.memory_space<vmem>>, vector<1x32xf32>
    %4 = vector.broadcast %3 : vector<1x32xf32> to vector<16x32xf32>
    %5 = arith.addf %2, %4 : vector<16x32xf32>
    %c0_5 = arith.constant 0 : index
    %c0_6 = arith.constant 0 : index
    %6 = vector.load %arg9[%c0_5, %c0_6] : memref<1x32xf32, #tpu.memory_space<vmem>>, vector<1x32xf32>
    %c0_7 = arith.constant 0 : index
    %c0_8 = arith.constant 0 : index
    %7 = vector.load %arg10[%c0_7, %c0_8] : memref<1x32xf32, #tpu.memory_space<vmem>>, vector<1x32xf32>
    %cst_9 = arith.constant dense<0.000000e+00> : vector<32xf32>
    %8 = vector.multi_reduction <add>, %5, %cst_9 [0] : vector<16x32xf32> to vector<32xf32>
    %9 = vector.shape_cast %8 : vector<32xf32> to vector<1x32xf32>
    %cst_10 = arith.constant 1.600000e+01 : f32
    %10 = vector.broadcast %cst_10 : f32 to vector<1x32xf32>
    %11 = arith.divf %9, %10 : vector<1x32xf32>
    %12 = vector.broadcast %11 : vector<1x32xf32> to vector<16x32xf32>
    %13 = arith.subf %5, %12 : vector<16x32xf32>
    %14 = arith.mulf %13, %13 : vector<16x32xf32>
    %cst_11 = arith.constant dense<0.000000e+00> : vector<32xf32>
    %15 = vector.multi_reduction <add>, %14, %cst_11 [0] : vector<16x32xf32> to vector<32xf32>
    %16 = vector.shape_cast %15 : vector<32xf32> to vector<1x32xf32>
    %cst_12 = arith.constant 1.600000e+01 : f32
    %17 = vector.broadcast %cst_12 : f32 to vector<1x32xf32>
    %18 = arith.divf %16, %17 : vector<1x32xf32>
    %19 = vector.broadcast %11 : vector<1x32xf32> to vector<16x32xf32>
    %20 = arith.subf %5, %19 : vector<16x32xf32>
    %cst_13 = arith.constant 9.99999974E-6 : f32
    %21 = vector.broadcast %cst_13 : f32 to vector<1x32xf32>
    %22 = arith.addf %18, %21 : vector<1x32xf32>
    %23 = math.rsqrt %22 : vector<1x32xf32>
    %24 = vector.broadcast %23 : vector<1x32xf32> to vector<16x32xf32>
    %25 = arith.mulf %20, %24 : vector<16x32xf32>
    %26 = vector.broadcast %6 : vector<1x32xf32> to vector<16x32xf32>
    %27 = arith.mulf %25, %26 : vector<16x32xf32>
    %28 = vector.broadcast %7 : vector<1x32xf32> to vector<16x32xf32>
    %29 = arith.addf %27, %28 : vector<16x32xf32>
    %c0_14 = arith.constant 0 : index
    %c0_15 = arith.constant 0 : index
    %30 = vector.load %arg1[%c0_14, %c0_15] : memref<32x2xf32, #tpu.memory_space<vmem>>, vector<32x2xf32>
    %c0_16 = arith.constant 0 : index
    %c0_17 = arith.constant 0 : index
    %31 = vector.load %arg7[%c0_16, %c0_17] : memref<2x16xf32, #tpu.memory_space<vmem>>, vector<2x16xf32>
    %cst_18 = arith.constant dense<0.000000e+00> : vector<32x16xf32>
    %32 = tpu.matmul %30, %31, %cst_18 {dimension_numbers = #tpu.dot_dimension_numbers<[1], [0], [0], [1], [0, 0, 1, 1], [], []>} : vector<32x2xf32>, vector<2x16xf32>, vector<32x16xf32> -> vector<32x16xf32>
    %c0_19 = arith.constant 0 : index
    %c0_20 = arith.constant 0 : index
    %33 = vector.load %arg8[%c0_19, %c0_20] : memref<1x16xf32, #tpu.memory_space<vmem>>, vector<1x16xf32>
    %34 = vector.broadcast %33 : vector<1x16xf32> to vector<32x16xf32>
    %35 = arith.addf %32, %34 : vector<32x16xf32>
    %c0_21 = arith.constant 0 : index
    %c0_22 = arith.constant 0 : index
    %36 = vector.load %arg11[%c0_21, %c0_22] : memref<1x16xf32, #tpu.memory_space<vmem>>, vector<1x16xf32>
    %c0_23 = arith.constant 0 : index
    %c0_24 = arith.constant 0 : index
    %37 = vector.load %arg12[%c0_23, %c0_24] : memref<1x16xf32, #tpu.memory_space<vmem>>, vector<1x16xf32>
    %cst_25 = arith.constant dense<0.000000e+00> : vector<16xf32>
    %38 = vector.multi_reduction <add>, %35, %cst_25 [0] : vector<32x16xf32> to vector<16xf32>
    %39 = vector.shape_cast %38 : vector<16xf32> to vector<1x16xf32>
    %cst_26 = arith.constant 3.200000e+01 : f32
    %40 = vector.broadcast %cst_26 : f32 to vector<1x16xf32>
    %41 = arith.divf %39, %40 : vector<1x16xf32>
    %42 = vector.broadcast %41 : vector<1x16xf32> to vector<32x16xf32>
    %43 = arith.subf %35, %42 : vector<32x16xf32>
    %44 = arith.mulf %43, %43 : vector<32x16xf32>
    %cst_27 = arith.constant dense<0.000000e+00> : vector<16xf32>
    %45 = vector.multi_reduction <add>, %44, %cst_27 [0] : vector<32x16xf32> to vector<16xf32>
    %46 = vector.shape_cast %45 : vector<16xf32> to vector<1x16xf32>
    %cst_28 = arith.constant 3.200000e+01 : f32
    %47 = vector.broadcast %cst_28 : f32 to vector<1x16xf32>
    %48 = arith.divf %46, %47 : vector<1x16xf32>
    %49 = vector.broadcast %41 : vector<1x16xf32> to vector<32x16xf32>
    %50 = arith.subf %35, %49 : vector<32x16xf32>
    %cst_29 = arith.constant 9.99999974E-6 : f32
    %51 = vector.broadcast %cst_29 : f32 to vector<1x16xf32>
    %52 = arith.addf %48, %51 : vector<1x16xf32>
    %53 = math.rsqrt %52 : vector<1x16xf32>
    %54 = vector.broadcast %53 : vector<1x16xf32> to vector<32x16xf32>
    %55 = arith.mulf %50, %54 : vector<32x16xf32>
    %56 = vector.broadcast %36 : vector<1x16xf32> to vector<32x16xf32>
    %57 = arith.mulf %55, %56 : vector<32x16xf32>
    %58 = vector.broadcast %37 : vector<1x16xf32> to vector<32x16xf32>
    %59 = arith.addf %57, %58 : vector<32x16xf32>
    %c0_30 = arith.constant 0 : index
    %c0_31 = arith.constant 0 : index
    %60 = vector.load %arg2[%c0_30, %c0_31] : memref<32x16xbf16, #tpu.memory_space<vmem>>, vector<32x16xbf16>
    %c0_32 = arith.constant 0 : index
    %c0_33 = arith.constant 0 : index
    %61 = vector.load %arg3[%c0_32, %c0_33] : memref<32x16xbf16, #tpu.memory_space<vmem>>, vector<32x16xbf16>
    %c0_34 = arith.constant 0 : index
    %c0_35 = arith.constant 0 : index
    %62 = vector.load %arg4[%c0_34, %c0_35] : memref<16x32xbf16, #tpu.memory_space<vmem>>, vector<16x32xbf16>
    %c0_36 = arith.constant 0 : index
    %c64 = arith.constant 64 : index
    %c0_37 = arith.constant 0 : index
    %63 = vector.load %arg15[%c0_36, %c64, %c0_37] : memref<3x80x32xf32, #tpu.memory_space<vmem>>, vector<1x16x32xf32>
    %64 = vector.shape_cast %63 : vector<1x16x32xf32> to vector<16x32xf32>
    %c1 = arith.constant 1 : index
    %c64_38 = arith.constant 64 : index
    %c0_39 = arith.constant 0 : index
    %65 = vector.load %arg15[%c1, %c64_38, %c0_39] : memref<3x80x32xf32, #tpu.memory_space<vmem>>, vector<1x16x32xf32>
    %66 = vector.shape_cast %65 : vector<1x16x32xf32> to vector<16x32xf32>
    %c2 = arith.constant 2 : index
    %c64_40 = arith.constant 64 : index
    %c0_41 = arith.constant 0 : index
    %67 = vector.load %arg15[%c2, %c64_40, %c0_41] : memref<3x80x32xf32, #tpu.memory_space<vmem>>, vector<1x16x32xf32>
    %68 = vector.shape_cast %67 : vector<1x16x32xf32> to vector<16x32xf32>
    %69 = tpu.concatenate %64, %66, %68 in 1 : vector<16x32xf32>, vector<16x32xf32>, vector<16x32xf32> -> vector<16x96xf32>
    %cst_42 = arith.constant dense<0.000000e+00> : vector<32x96xf32>
    %70 = tpu.matmul %59, %69, %cst_42 {dimension_numbers = #tpu.dot_dimension_numbers<[1], [0], [0], [1], [0, 0, 1, 1], [], []>} : vector<32x16xf32>, vector<16x96xf32>, vector<32x96xf32> -> vector<32x96xf32>
    %c0_43 = arith.constant 0 : index
    %c0_44 = arith.constant 0 : index
    %c0_45 = arith.constant 0 : index
    %71 = vector.load %arg15[%c0_43, %c0_44, %c0_45] : memref<3x80x32xf32, #tpu.memory_space<vmem>>, vector<1x32x32xf32>
    %72 = vector.shape_cast %71 : vector<1x32x32xf32> to vector<32x32xf32>
    %c0_46 = arith.constant 0 : index
    %c32 = arith.constant 32 : index
    %c0_47 = arith.constant 0 : index
    %73 = vector.load %arg15[%c0_46, %c32, %c0_47] : memref<3x80x32xf32, #tpu.memory_space<vmem>>, vector<1x32x32xf32>
    %74 = vector.shape_cast %73 : vector<1x32x32xf32> to vector<32x32xf32>
    %c0_48 = arith.constant 0 : index
    %c0_49 = arith.constant 0 : index
    %c0_50 = arith.constant 0 : index
    %75 = vector.load %arg13[%c0_48, %c0_49, %c0_50] : memref<3x32x32xf32, #tpu.memory_space<vmem>>, vector<1x32x32xf32>
    %76 = vector.shape_cast %75 : vector<1x32x32xf32> to vector<32x32xf32>
    %cst_51 = arith.constant dense<0.000000e+00> : vector<16x32xf32>
    %77 = tpu.matmul %29, %76, %cst_51 {dimension_numbers = #tpu.dot_dimension_numbers<[1], [0], [0], [1], [0, 0, 1, 1], [], []>} : vector<16x32xf32>, vector<32x32xf32>, vector<16x32xf32> -> vector<16x32xf32>
    %c0_52 = arith.constant 0 : index
    %c0_53 = arith.constant 0 : index
    %c0_54 = arith.constant 0 : index
    %78 = vector.load %arg14[%c0_52, %c0_53, %c0_54] : memref<3x1x32xf32, #tpu.memory_space<vmem>>, vector<1x1x32xf32>
    %79 = vector.shape_cast %78 : vector<1x1x32xf32> to vector<1x32xf32>
    %80 = vector.broadcast %79 : vector<1x32xf32> to vector<16x32xf32>
    %81 = arith.addf %77, %80 : vector<16x32xf32>
    %cst_55 = arith.constant dense<0.000000e+00> : vector<16x32xf32>
    %82 = tpu.matmul %81, %72, %cst_55 {dimension_numbers = #tpu.dot_dimension_numbers<[1], [0], [0], [1], [0, 0, 1, 1], [], []>} : vector<16x32xf32>, vector<32x32xf32>, vector<16x32xf32> -> vector<16x32xf32>
    %cst_56 = arith.constant dense<0.000000e+00> : vector<16x32xf32>
    %83 = tpu.matmul %81, %74, %cst_56 {dimension_numbers = #tpu.dot_dimension_numbers<[1], [0], [0], [1], [0, 0, 1, 1], [], []>} : vector<16x32xf32>, vector<32x32xf32>, vector<16x32xf32> -> vector<16x32xf32>
    %84 = arith.truncf %81 : vector<16x32xf32> to vector<16x32xbf16>
    %85 = arith.extf %84 : vector<16x32xbf16> to vector<16x32xf32>
    %86 = arith.subf %81, %85 : vector<16x32xf32>
    %87 = arith.truncf %86 : vector<16x32xf32> to vector<16x32xbf16>
    %88 = arith.truncf %83 : vector<16x32xf32> to vector<16x32xbf16>
    %89 = arith.extf %88 : vector<16x32xbf16> to vector<16x32xf32>
    %90 = arith.subf %83, %89 : vector<16x32xf32>
    %91 = arith.truncf %90 : vector<16x32xf32> to vector<16x32xbf16>
    %92 = arith.truncf %82 : vector<16x32xf32> to vector<16x32xbf16>
    %93 = arith.extf %92 : vector<16x32xbf16> to vector<16x32xf32>
    %94 = arith.subf %82, %93 : vector<16x32xf32>
    %95 = arith.truncf %94 : vector<16x32xf32> to vector<16x32xbf16>
    %96 = tpu.concatenate %84, %87, %88, %91 in 1 : vector<16x32xbf16>, vector<16x32xbf16>, vector<16x32xbf16>, vector<16x32xbf16> -> vector<16x128xbf16>
    %97 = tpu.concatenate %92, %95 in 1 : vector<16x32xbf16>, vector<16x32xbf16> -> vector<16x64xbf16>
    %cst_57 = arith.constant dense<0.000000e+00> : vector<32x128xf32>
    %98 = tpu.matmul %60, %96, %cst_57 {dimension_numbers = #tpu.dot_dimension_numbers<[1], [0], [0], [1], [0, 0, 1, 1], [], []>} : vector<32x16xbf16>, vector<16x128xbf16>, vector<32x128xf32> -> vector<32x128xf32>
    %99 = vector.extract_strided_slice %98 {offsets = [0, 0], sizes = [32, 32], strides = [1, 1]} : vector<32x128xf32> to vector<32x32xf32>
    %100 = vector.extract_strided_slice %98 {offsets = [0, 32], sizes = [32, 32], strides = [1, 1]} : vector<32x128xf32> to vector<32x32xf32>
    %101 = arith.addf %99, %100 : vector<32x32xf32>
    %102 = vector.extract_strided_slice %98 {offsets = [0, 64], sizes = [32, 32], strides = [1, 1]} : vector<32x128xf32> to vector<32x32xf32>
    %103 = vector.extract_strided_slice %98 {offsets = [0, 96], sizes = [32, 32], strides = [1, 1]} : vector<32x128xf32> to vector<32x32xf32>
    %104 = arith.addf %102, %103 : vector<32x32xf32>
    %cst_58 = arith.constant dense<0.000000e+00> : vector<32x64xf32>
    %105 = tpu.matmul %61, %97, %cst_58 {dimension_numbers = #tpu.dot_dimension_numbers<[1], [0], [0], [1], [0, 0, 1, 1], [], []>} : vector<32x16xbf16>, vector<16x64xbf16>, vector<32x64xf32> -> vector<32x64xf32>
    %106 = vector.extract_strided_slice %105 {offsets = [0, 0], sizes = [32, 32], strides = [1, 1]} : vector<32x64xf32> to vector<32x32xf32>
    %107 = vector.extract_strided_slice %105 {offsets = [0, 32], sizes = [32, 32], strides = [1, 1]} : vector<32x64xf32> to vector<32x32xf32>
    %108 = arith.addf %106, %107 : vector<32x32xf32>
    %109 = arith.addf %108, %104 : vector<32x32xf32>
    %110 = vector.extract_strided_slice %70 {offsets = [0, 0], sizes = [32, 32], strides = [1, 1]} : vector<32x96xf32> to vector<32x32xf32>
    %111 = arith.addf %109, %110 : vector<32x32xf32>
    %c0_59 = arith.constant 0 : index
    %c0_60 = arith.constant 0 : index
    %c0_61 = arith.constant 0 : index
    %112 = vector.load %arg16[%c0_59, %c0_60, %c0_61] : memref<3x1x32xf32, #tpu.memory_space<vmem>>, vector<1x1x32xf32>
    %113 = vector.shape_cast %112 : vector<1x1x32xf32> to vector<1x32xf32>
    %114 = vector.broadcast %113 : vector<1x32xf32> to vector<32x32xf32>
    %115 = arith.addf %111, %114 : vector<32x32xf32>
    %cst_62 = arith.constant 0.000000e+00 : f32
    %116 = vector.broadcast %cst_62 : f32 to vector<32x32xf32>
    %117 = arith.cmpf ogt, %115, %116 : vector<32x32xf32>
    %cst_63 = arith.constant 2.000000e-01 : f32
    %118 = vector.broadcast %cst_63 : f32 to vector<32x32xf32>
    %119 = arith.mulf %118, %115 : vector<32x32xf32>
    %120 = arith.select %117, %115, %119 : vector<32x32xi1>, vector<32x32xf32>
    %cst_64 = arith.constant dense<0xFF800000> : vector<32xf32>
    %121 = vector.multi_reduction <maximumf>, %120, %cst_64 [0] : vector<32x32xf32> to vector<32xf32>
    %122 = vector.shape_cast %121 : vector<32xf32> to vector<1x32xf32>
    %123 = vector.broadcast %122 : vector<1x32xf32> to vector<32x32xf32>
    %124 = arith.subf %120, %123 : vector<32x32xf32>
    %125 = math.exp %124 : vector<32x32xf32>
    %126 = arith.mulf %101, %125 : vector<32x32xf32>
    %127 = arith.truncf %125 : vector<32x32xf32> to vector<32x32xbf16>
    %128 = arith.extf %127 : vector<32x32xbf16> to vector<32x32xf32>
    %129 = arith.subf %125, %128 : vector<32x32xf32>
    %130 = arith.truncf %129 : vector<32x32xf32> to vector<32x32xbf16>
    %131 = arith.truncf %126 : vector<32x32xf32> to vector<32x32xbf16>
    %132 = arith.extf %131 : vector<32x32xbf16> to vector<32x32xf32>
    %133 = arith.subf %126, %132 : vector<32x32xf32>
    %134 = arith.truncf %133 : vector<32x32xf32> to vector<32x32xbf16>
    %135 = tpu.concatenate %127, %130, %131, %134 in 1 : vector<32x32xbf16>, vector<32x32xbf16>, vector<32x32xbf16>, vector<32x32xbf16> -> vector<32x128xbf16>
    %cst_65 = arith.constant dense<0.000000e+00> : vector<16x128xf32>
    %136 = tpu.matmul %62, %135, %cst_65 {dimension_numbers = #tpu.dot_dimension_numbers<[1], [0], [0], [1], [0, 0, 1, 1], [], []>} : vector<16x32xbf16>, vector<32x128xbf16>, vector<16x128xf32> -> vector<16x128xf32>
    %137 = vector.extract_strided_slice %136 {offsets = [0, 0], sizes = [16, 32], strides = [1, 1]} : vector<16x128xf32> to vector<16x32xf32>
    %138 = vector.extract_strided_slice %136 {offsets = [0, 32], sizes = [16, 32], strides = [1, 1]} : vector<16x128xf32> to vector<16x32xf32>
    %139 = arith.addf %137, %138 : vector<16x32xf32>
    %cst_66 = arith.constant 1.000000e-16 : f32
    %140 = vector.broadcast %cst_66 : f32 to vector<16x32xf32>
    %141 = arith.addf %139, %140 : vector<16x32xf32>
    %142 = vector.extract_strided_slice %136 {offsets = [0, 64], sizes = [16, 32], strides = [1, 1]} : vector<16x128xf32> to vector<16x32xf32>
    %143 = vector.extract_strided_slice %136 {offsets = [0, 96], sizes = [16, 32], strides = [1, 1]} : vector<16x128xf32> to vector<16x32xf32>
    %144 = arith.addf %142, %143 : vector<16x32xf32>
    %145 = tpu.reciprocal %141 {approx = true} : vector<16x32xf32> -> vector<16x32xf32>
    %146 = arith.mulf %141, %145 : vector<16x32xf32>
    %cst_67 = arith.constant 2.000000e+00 : f32
    %147 = vector.broadcast %cst_67 : f32 to vector<16x32xf32>
    %148 = arith.subf %147, %146 : vector<16x32xf32>
    %149 = arith.mulf %145, %148 : vector<16x32xf32>
    %150 = arith.mulf %144, %149 : vector<16x32xf32>
    %151 = arith.addf %29, %150 : vector<16x32xf32>
    %c1_68 = arith.constant 1 : index
    %c0_69 = arith.constant 0 : index
    %c0_70 = arith.constant 0 : index
    %152 = vector.load %arg15[%c1_68, %c0_69, %c0_70] : memref<3x80x32xf32, #tpu.memory_space<vmem>>, vector<1x32x32xf32>
    %153 = vector.shape_cast %152 : vector<1x32x32xf32> to vector<32x32xf32>
    %c1_71 = arith.constant 1 : index
    %c32_72 = arith.constant 32 : index
    %c0_73 = arith.constant 0 : index
    %154 = vector.load %arg15[%c1_71, %c32_72, %c0_73] : memref<3x80x32xf32, #tpu.memory_space<vmem>>, vector<1x32x32xf32>
    %155 = vector.shape_cast %154 : vector<1x32x32xf32> to vector<32x32xf32>
    %c1_74 = arith.constant 1 : index
    %c0_75 = arith.constant 0 : index
    %c0_76 = arith.constant 0 : index
    %156 = vector.load %arg13[%c1_74, %c0_75, %c0_76] : memref<3x32x32xf32, #tpu.memory_space<vmem>>, vector<1x32x32xf32>
    %157 = vector.shape_cast %156 : vector<1x32x32xf32> to vector<32x32xf32>
    %cst_77 = arith.constant dense<0.000000e+00> : vector<16x32xf32>
    %158 = tpu.matmul %151, %157, %cst_77 {dimension_numbers = #tpu.dot_dimension_numbers<[1], [0], [0], [1], [0, 0, 1, 1], [], []>} : vector<16x32xf32>, vector<32x32xf32>, vector<16x32xf32> -> vector<16x32xf32>
    %c1_78 = arith.constant 1 : index
    %c0_79 = arith.constant 0 : index
    %c0_80 = arith.constant 0 : index
    %159 = vector.load %arg14[%c1_78, %c0_79, %c0_80] : memref<3x1x32xf32, #tpu.memory_space<vmem>>, vector<1x1x32xf32>
    %160 = vector.shape_cast %159 : vector<1x1x32xf32> to vector<1x32xf32>
    %161 = vector.broadcast %160 : vector<1x32xf32> to vector<16x32xf32>
    %162 = arith.addf %158, %161 : vector<16x32xf32>
    %cst_81 = arith.constant dense<0.000000e+00> : vector<16x32xf32>
    %163 = tpu.matmul %162, %153, %cst_81 {dimension_numbers = #tpu.dot_dimension_numbers<[1], [0], [0], [1], [0, 0, 1, 1], [], []>} : vector<16x32xf32>, vector<32x32xf32>, vector<16x32xf32> -> vector<16x32xf32>
    %cst_82 = arith.constant dense<0.000000e+00> : vector<16x32xf32>
    %164 = tpu.matmul %162, %155, %cst_82 {dimension_numbers = #tpu.dot_dimension_numbers<[1], [0], [0], [1], [0, 0, 1, 1], [], []>} : vector<16x32xf32>, vector<32x32xf32>, vector<16x32xf32> -> vector<16x32xf32>
    %165 = arith.truncf %162 : vector<16x32xf32> to vector<16x32xbf16>
    %166 = arith.extf %165 : vector<16x32xbf16> to vector<16x32xf32>
    %167 = arith.subf %162, %166 : vector<16x32xf32>
    %168 = arith.truncf %167 : vector<16x32xf32> to vector<16x32xbf16>
    %169 = arith.truncf %164 : vector<16x32xf32> to vector<16x32xbf16>
    %170 = arith.extf %169 : vector<16x32xbf16> to vector<16x32xf32>
    %171 = arith.subf %164, %170 : vector<16x32xf32>
    %172 = arith.truncf %171 : vector<16x32xf32> to vector<16x32xbf16>
    %173 = arith.truncf %163 : vector<16x32xf32> to vector<16x32xbf16>
    %174 = arith.extf %173 : vector<16x32xbf16> to vector<16x32xf32>
    %175 = arith.subf %163, %174 : vector<16x32xf32>
    %176 = arith.truncf %175 : vector<16x32xf32> to vector<16x32xbf16>
    %177 = tpu.concatenate %165, %168, %169, %172 in 1 : vector<16x32xbf16>, vector<16x32xbf16>, vector<16x32xbf16>, vector<16x32xbf16> -> vector<16x128xbf16>
    %178 = tpu.concatenate %173, %176 in 1 : vector<16x32xbf16>, vector<16x32xbf16> -> vector<16x64xbf16>
    %cst_83 = arith.constant dense<0.000000e+00> : vector<32x128xf32>
    %179 = tpu.matmul %60, %177, %cst_83 {dimension_numbers = #tpu.dot_dimension_numbers<[1], [0], [0], [1], [0, 0, 1, 1], [], []>} : vector<32x16xbf16>, vector<16x128xbf16>, vector<32x128xf32> -> vector<32x128xf32>
    %180 = vector.extract_strided_slice %179 {offsets = [0, 0], sizes = [32, 32], strides = [1, 1]} : vector<32x128xf32> to vector<32x32xf32>
    %181 = vector.extract_strided_slice %179 {offsets = [0, 32], sizes = [32, 32], strides = [1, 1]} : vector<32x128xf32> to vector<32x32xf32>
    %182 = arith.addf %180, %181 : vector<32x32xf32>
    %183 = vector.extract_strided_slice %179 {offsets = [0, 64], sizes = [32, 32], strides = [1, 1]} : vector<32x128xf32> to vector<32x32xf32>
    %184 = vector.extract_strided_slice %179 {offsets = [0, 96], sizes = [32, 32], strides = [1, 1]} : vector<32x128xf32> to vector<32x32xf32>
    %185 = arith.addf %183, %184 : vector<32x32xf32>
    %cst_84 = arith.constant dense<0.000000e+00> : vector<32x64xf32>
    %186 = tpu.matmul %61, %178, %cst_84 {dimension_numbers = #tpu.dot_dimension_numbers<[1], [0], [0], [1], [0, 0, 1, 1], [], []>} : vector<32x16xbf16>, vector<16x64xbf16>, vector<32x64xf32> -> vector<32x64xf32>
    %187 = vector.extract_strided_slice %186 {offsets = [0, 0], sizes = [32, 32], strides = [1, 1]} : vector<32x64xf32> to vector<32x32xf32>
    %188 = vector.extract_strided_slice %186 {offsets = [0, 32], sizes = [32, 32], strides = [1, 1]} : vector<32x64xf32> to vector<32x32xf32>
    %189 = arith.addf %187, %188 : vector<32x32xf32>
    %190 = arith.addf %189, %185 : vector<32x32xf32>
    %191 = vector.extract_strided_slice %70 {offsets = [0, 32], sizes = [32, 32], strides = [1, 1]} : vector<32x96xf32> to vector<32x32xf32>
    %192 = arith.addf %190, %191 : vector<32x32xf32>
    %c1_85 = arith.constant 1 : index
    %c0_86 = arith.constant 0 : index
    %c0_87 = arith.constant 0 : index
    %193 = vector.load %arg16[%c1_85, %c0_86, %c0_87] : memref<3x1x32xf32, #tpu.memory_space<vmem>>, vector<1x1x32xf32>
    %194 = vector.shape_cast %193 : vector<1x1x32xf32> to vector<1x32xf32>
    %195 = vector.broadcast %194 : vector<1x32xf32> to vector<32x32xf32>
    %196 = arith.addf %192, %195 : vector<32x32xf32>
    %cst_88 = arith.constant 0.000000e+00 : f32
    %197 = vector.broadcast %cst_88 : f32 to vector<32x32xf32>
    %198 = arith.cmpf ogt, %196, %197 : vector<32x32xf32>
    %cst_89 = arith.constant 2.000000e-01 : f32
    %199 = vector.broadcast %cst_89 : f32 to vector<32x32xf32>
    %200 = arith.mulf %199, %196 : vector<32x32xf32>
    %201 = arith.select %198, %196, %200 : vector<32x32xi1>, vector<32x32xf32>
    %cst_90 = arith.constant dense<0xFF800000> : vector<32xf32>
    %202 = vector.multi_reduction <maximumf>, %201, %cst_90 [0] : vector<32x32xf32> to vector<32xf32>
    %203 = vector.shape_cast %202 : vector<32xf32> to vector<1x32xf32>
    %204 = vector.broadcast %203 : vector<1x32xf32> to vector<32x32xf32>
    %205 = arith.subf %201, %204 : vector<32x32xf32>
    %206 = math.exp %205 : vector<32x32xf32>
    %207 = arith.mulf %182, %206 : vector<32x32xf32>
    %208 = arith.truncf %206 : vector<32x32xf32> to vector<32x32xbf16>
    %209 = arith.extf %208 : vector<32x32xbf16> to vector<32x32xf32>
    %210 = arith.subf %206, %209 : vector<32x32xf32>
    %211 = arith.truncf %210 : vector<32x32xf32> to vector<32x32xbf16>
    %212 = arith.truncf %207 : vector<32x32xf32> to vector<32x32xbf16>
    %213 = arith.extf %212 : vector<32x32xbf16> to vector<32x32xf32>
    %214 = arith.subf %207, %213 : vector<32x32xf32>
    %215 = arith.truncf %214 : vector<32x32xf32> to vector<32x32xbf16>
    %216 = tpu.concatenate %208, %211, %212, %215 in 1 : vector<32x32xbf16>, vector<32x32xbf16>, vector<32x32xbf16>, vector<32x32xbf16> -> vector<32x128xbf16>
    %cst_91 = arith.constant dense<0.000000e+00> : vector<16x128xf32>
    %217 = tpu.matmul %62, %216, %cst_91 {dimension_numbers = #tpu.dot_dimension_numbers<[1], [0], [0], [1], [0, 0, 1, 1], [], []>} : vector<16x32xbf16>, vector<32x128xbf16>, vector<16x128xf32> -> vector<16x128xf32>
    %218 = vector.extract_strided_slice %217 {offsets = [0, 0], sizes = [16, 32], strides = [1, 1]} : vector<16x128xf32> to vector<16x32xf32>
    %219 = vector.extract_strided_slice %217 {offsets = [0, 32], sizes = [16, 32], strides = [1, 1]} : vector<16x128xf32> to vector<16x32xf32>
    %220 = arith.addf %218, %219 : vector<16x32xf32>
    %cst_92 = arith.constant 1.000000e-16 : f32
    %221 = vector.broadcast %cst_92 : f32 to vector<16x32xf32>
    %222 = arith.addf %220, %221 : vector<16x32xf32>
    %223 = vector.extract_strided_slice %217 {offsets = [0, 64], sizes = [16, 32], strides = [1, 1]} : vector<16x128xf32> to vector<16x32xf32>
    %224 = vector.extract_strided_slice %217 {offsets = [0, 96], sizes = [16, 32], strides = [1, 1]} : vector<16x128xf32> to vector<16x32xf32>
    %225 = arith.addf %223, %224 : vector<16x32xf32>
    %226 = tpu.reciprocal %222 {approx = true} : vector<16x32xf32> -> vector<16x32xf32>
    %227 = arith.mulf %222, %226 : vector<16x32xf32>
    %cst_93 = arith.constant 2.000000e+00 : f32
    %228 = vector.broadcast %cst_93 : f32 to vector<16x32xf32>
    %229 = arith.subf %228, %227 : vector<16x32xf32>
    %230 = arith.mulf %226, %229 : vector<16x32xf32>
    %231 = arith.mulf %225, %230 : vector<16x32xf32>
    %232 = arith.addf %151, %231 : vector<16x32xf32>
    %c2_94 = arith.constant 2 : index
    %c0_95 = arith.constant 0 : index
    %c0_96 = arith.constant 0 : index
    %233 = vector.load %arg15[%c2_94, %c0_95, %c0_96] : memref<3x80x32xf32, #tpu.memory_space<vmem>>, vector<1x32x32xf32>
    %234 = vector.shape_cast %233 : vector<1x32x32xf32> to vector<32x32xf32>
    %c2_97 = arith.constant 2 : index
    %c32_98 = arith.constant 32 : index
    %c0_99 = arith.constant 0 : index
    %235 = vector.load %arg15[%c2_97, %c32_98, %c0_99] : memref<3x80x32xf32, #tpu.memory_space<vmem>>, vector<1x32x32xf32>
    %236 = vector.shape_cast %235 : vector<1x32x32xf32> to vector<32x32xf32>
    %c2_100 = arith.constant 2 : index
    %c0_101 = arith.constant 0 : index
    %c0_102 = arith.constant 0 : index
    %237 = vector.load %arg13[%c2_100, %c0_101, %c0_102] : memref<3x32x32xf32, #tpu.memory_space<vmem>>, vector<1x32x32xf32>
    %238 = vector.shape_cast %237 : vector<1x32x32xf32> to vector<32x32xf32>
    %cst_103 = arith.constant dense<0.000000e+00> : vector<16x32xf32>
    %239 = tpu.matmul %232, %238, %cst_103 {dimension_numbers = #tpu.dot_dimension_numbers<[1], [0], [0], [1], [0, 0, 1, 1], [], []>} : vector<16x32xf32>, vector<32x32xf32>, vector<16x32xf32> -> vector<16x32xf32>
    %c2_104 = arith.constant 2 : index
    %c0_105 = arith.constant 0 : index
    %c0_106 = arith.constant 0 : index
    %240 = vector.load %arg14[%c2_104, %c0_105, %c0_106] : memref<3x1x32xf32, #tpu.memory_space<vmem>>, vector<1x1x32xf32>
    %241 = vector.shape_cast %240 : vector<1x1x32xf32> to vector<1x32xf32>
    %242 = vector.broadcast %241 : vector<1x32xf32> to vector<16x32xf32>
    %243 = arith.addf %239, %242 : vector<16x32xf32>
    %cst_107 = arith.constant dense<0.000000e+00> : vector<16x32xf32>
    %244 = tpu.matmul %243, %234, %cst_107 {dimension_numbers = #tpu.dot_dimension_numbers<[1], [0], [0], [1], [0, 0, 1, 1], [], []>} : vector<16x32xf32>, vector<32x32xf32>, vector<16x32xf32> -> vector<16x32xf32>
    %cst_108 = arith.constant dense<0.000000e+00> : vector<16x32xf32>
    %245 = tpu.matmul %243, %236, %cst_108 {dimension_numbers = #tpu.dot_dimension_numbers<[1], [0], [0], [1], [0, 0, 1, 1], [], []>} : vector<16x32xf32>, vector<32x32xf32>, vector<16x32xf32> -> vector<16x32xf32>
    %246 = arith.truncf %243 : vector<16x32xf32> to vector<16x32xbf16>
    %247 = arith.extf %246 : vector<16x32xbf16> to vector<16x32xf32>
    %248 = arith.subf %243, %247 : vector<16x32xf32>
    %249 = arith.truncf %248 : vector<16x32xf32> to vector<16x32xbf16>
    %250 = arith.truncf %245 : vector<16x32xf32> to vector<16x32xbf16>
    %251 = arith.extf %250 : vector<16x32xbf16> to vector<16x32xf32>
    %252 = arith.subf %245, %251 : vector<16x32xf32>
    %253 = arith.truncf %252 : vector<16x32xf32> to vector<16x32xbf16>
    %254 = arith.truncf %244 : vector<16x32xf32> to vector<16x32xbf16>
    %255 = arith.extf %254 : vector<16x32xbf16> to vector<16x32xf32>
    %256 = arith.subf %244, %255 : vector<16x32xf32>
    %257 = arith.truncf %256 : vector<16x32xf32> to vector<16x32xbf16>
    %258 = tpu.concatenate %246, %249, %250, %253 in 1 : vector<16x32xbf16>, vector<16x32xbf16>, vector<16x32xbf16>, vector<16x32xbf16> -> vector<16x128xbf16>
    %259 = tpu.concatenate %254, %257 in 1 : vector<16x32xbf16>, vector<16x32xbf16> -> vector<16x64xbf16>
    %cst_109 = arith.constant dense<0.000000e+00> : vector<32x128xf32>
    %260 = tpu.matmul %60, %258, %cst_109 {dimension_numbers = #tpu.dot_dimension_numbers<[1], [0], [0], [1], [0, 0, 1, 1], [], []>} : vector<32x16xbf16>, vector<16x128xbf16>, vector<32x128xf32> -> vector<32x128xf32>
    %261 = vector.extract_strided_slice %260 {offsets = [0, 0], sizes = [32, 32], strides = [1, 1]} : vector<32x128xf32> to vector<32x32xf32>
    %262 = vector.extract_strided_slice %260 {offsets = [0, 32], sizes = [32, 32], strides = [1, 1]} : vector<32x128xf32> to vector<32x32xf32>
    %263 = arith.addf %261, %262 : vector<32x32xf32>
    %264 = vector.extract_strided_slice %260 {offsets = [0, 64], sizes = [32, 32], strides = [1, 1]} : vector<32x128xf32> to vector<32x32xf32>
    %265 = vector.extract_strided_slice %260 {offsets = [0, 96], sizes = [32, 32], strides = [1, 1]} : vector<32x128xf32> to vector<32x32xf32>
    %266 = arith.addf %264, %265 : vector<32x32xf32>
    %cst_110 = arith.constant dense<0.000000e+00> : vector<32x64xf32>
    %267 = tpu.matmul %61, %259, %cst_110 {dimension_numbers = #tpu.dot_dimension_numbers<[1], [0], [0], [1], [0, 0, 1, 1], [], []>} : vector<32x16xbf16>, vector<16x64xbf16>, vector<32x64xf32> -> vector<32x64xf32>
    %268 = vector.extract_strided_slice %267 {offsets = [0, 0], sizes = [32, 32], strides = [1, 1]} : vector<32x64xf32> to vector<32x32xf32>
    %269 = vector.extract_strided_slice %267 {offsets = [0, 32], sizes = [32, 32], strides = [1, 1]} : vector<32x64xf32> to vector<32x32xf32>
    %270 = arith.addf %268, %269 : vector<32x32xf32>
    %271 = arith.addf %270, %266 : vector<32x32xf32>
    %272 = vector.extract_strided_slice %70 {offsets = [0, 64], sizes = [32, 32], strides = [1, 1]} : vector<32x96xf32> to vector<32x32xf32>
    %273 = arith.addf %271, %272 : vector<32x32xf32>
    %c2_111 = arith.constant 2 : index
    %c0_112 = arith.constant 0 : index
    %c0_113 = arith.constant 0 : index
    %274 = vector.load %arg16[%c2_111, %c0_112, %c0_113] : memref<3x1x32xf32, #tpu.memory_space<vmem>>, vector<1x1x32xf32>
    %275 = vector.shape_cast %274 : vector<1x1x32xf32> to vector<1x32xf32>
    %276 = vector.broadcast %275 : vector<1x32xf32> to vector<32x32xf32>
    %277 = arith.addf %273, %276 : vector<32x32xf32>
    %cst_114 = arith.constant 0.000000e+00 : f32
    %278 = vector.broadcast %cst_114 : f32 to vector<32x32xf32>
    %279 = arith.cmpf ogt, %277, %278 : vector<32x32xf32>
    %cst_115 = arith.constant 2.000000e-01 : f32
    %280 = vector.broadcast %cst_115 : f32 to vector<32x32xf32>
    %281 = arith.mulf %280, %277 : vector<32x32xf32>
    %282 = arith.select %279, %277, %281 : vector<32x32xi1>, vector<32x32xf32>
    %cst_116 = arith.constant dense<0xFF800000> : vector<32xf32>
    %283 = vector.multi_reduction <maximumf>, %282, %cst_116 [0] : vector<32x32xf32> to vector<32xf32>
    %284 = vector.shape_cast %283 : vector<32xf32> to vector<1x32xf32>
    %285 = vector.broadcast %284 : vector<1x32xf32> to vector<32x32xf32>
    %286 = arith.subf %282, %285 : vector<32x32xf32>
    %287 = math.exp %286 : vector<32x32xf32>
    %288 = arith.mulf %263, %287 : vector<32x32xf32>
    %289 = arith.truncf %287 : vector<32x32xf32> to vector<32x32xbf16>
    %290 = arith.extf %289 : vector<32x32xbf16> to vector<32x32xf32>
    %291 = arith.subf %287, %290 : vector<32x32xf32>
    %292 = arith.truncf %291 : vector<32x32xf32> to vector<32x32xbf16>
    %293 = arith.truncf %288 : vector<32x32xf32> to vector<32x32xbf16>
    %294 = arith.extf %293 : vector<32x32xbf16> to vector<32x32xf32>
    %295 = arith.subf %288, %294 : vector<32x32xf32>
    %296 = arith.truncf %295 : vector<32x32xf32> to vector<32x32xbf16>
    %297 = tpu.concatenate %289, %292, %293, %296 in 1 : vector<32x32xbf16>, vector<32x32xbf16>, vector<32x32xbf16>, vector<32x32xbf16> -> vector<32x128xbf16>
    %cst_117 = arith.constant dense<0.000000e+00> : vector<16x128xf32>
    %298 = tpu.matmul %62, %297, %cst_117 {dimension_numbers = #tpu.dot_dimension_numbers<[1], [0], [0], [1], [0, 0, 1, 1], [], []>} : vector<16x32xbf16>, vector<32x128xbf16>, vector<16x128xf32> -> vector<16x128xf32>
    %299 = vector.extract_strided_slice %298 {offsets = [0, 0], sizes = [16, 32], strides = [1, 1]} : vector<16x128xf32> to vector<16x32xf32>
    %300 = vector.extract_strided_slice %298 {offsets = [0, 32], sizes = [16, 32], strides = [1, 1]} : vector<16x128xf32> to vector<16x32xf32>
    %301 = arith.addf %299, %300 : vector<16x32xf32>
    %cst_118 = arith.constant 1.000000e-16 : f32
    %302 = vector.broadcast %cst_118 : f32 to vector<16x32xf32>
    %303 = arith.addf %301, %302 : vector<16x32xf32>
    %304 = vector.extract_strided_slice %298 {offsets = [0, 64], sizes = [16, 32], strides = [1, 1]} : vector<16x128xf32> to vector<16x32xf32>
    %305 = vector.extract_strided_slice %298 {offsets = [0, 96], sizes = [16, 32], strides = [1, 1]} : vector<16x128xf32> to vector<16x32xf32>
    %306 = arith.addf %304, %305 : vector<16x32xf32>
    %307 = tpu.reciprocal %303 {approx = true} : vector<16x32xf32> -> vector<16x32xf32>
    %308 = arith.mulf %303, %307 : vector<16x32xf32>
    %cst_119 = arith.constant 2.000000e+00 : f32
    %309 = vector.broadcast %cst_119 : f32 to vector<16x32xf32>
    %310 = arith.subf %309, %308 : vector<16x32xf32>
    %311 = arith.mulf %307, %310 : vector<16x32xf32>
    %312 = arith.mulf %306, %311 : vector<16x32xf32>
    %313 = arith.addf %232, %312 : vector<16x32xf32>
    %c0_120 = arith.constant 0 : index
    %c0_121 = arith.constant 0 : index
    %314 = vector.load %arg17[%c0_120, %c0_121] : memref<16x32xf32, #tpu.memory_space<vmem>>, vector<16x32xf32>
    tpu.vector_store %arg17[%c0_120, %c0_121], %313 {strides = array<i32>} : memref<16x32xf32, #tpu.memory_space<vmem>>, vector<16x32xf32>,
    return
  }
}

</mosaic_0001>

<llo_original>
// kernel: tpu_custom_call.1
$region0: #{tpu_custom_call.1}
  #allocation0 [shape = 'u32[]', space=smem, size = 0x4, offset = 0x4, fixed_abs, tag = 'smem constant byte address 0x4 - core index']
  #allocation1 [shape = 'u32[144,128]{1,0:T(1,128)}', space=vmem, size = 0x12000, scoped, tag = 'internal scratch']
  %s0 = inlined_call_operand.vmem [shape: f32[16,3], index: 0, kind: input, shape index: {}]
  %s1 = inlined_call_operand.vmem [shape: f32[32,2], index: 1, kind: input, shape index: {}]
  %s2 = inlined_call_operand.vmem [shape: bf16[32,16], index: 2, kind: input, shape index: {}]
  %s3 = inlined_call_operand.vmem [shape: bf16[32,16], index: 3, kind: input, shape index: {}]
  %s4 = inlined_call_operand.vmem [shape: bf16[16,32], index: 4, kind: input, shape index: {}]
  %s5 = inlined_call_operand.vmem [shape: f32[3,32], index: 5, kind: input, shape index: {}]
  %s6 = inlined_call_operand.vmem [shape: f32[1,32], index: 6, kind: input, shape index: {}]
  %s7 = inlined_call_operand.vmem [shape: f32[2,16], index: 7, kind: input, shape index: {}]
  %s8 = inlined_call_operand.vmem [shape: f32[1,16], index: 8, kind: input, shape index: {}]
  %s9 = inlined_call_operand.vmem [shape: f32[1,32], index: 9, kind: input, shape index: {}]
  %s10 = inlined_call_operand.vmem [shape: f32[1,32], index: 10, kind: input, shape index: {}]
  %s11 = inlined_call_operand.vmem [shape: f32[1,16], index: 11, kind: input, shape index: {}]
  %s12 = inlined_call_operand.vmem [shape: f32[1,16], index: 12, kind: input, shape index: {}]
  %s13 = inlined_call_operand.vmem [shape: f32[3,32,32], index: 13, kind: input, shape index: {}]
  %s14 = inlined_call_operand.vmem [shape: f32[3,1,32], index: 14, kind: input, shape index: {}]
  %s15 = inlined_call_operand.vmem [shape: f32[3,80,32], index: 15, kind: input, shape index: {}]
  %s16 = inlined_call_operand.vmem [shape: f32[3,1,32], index: 16, kind: input, shape index: {}]
  %s17 = inlined_call_operand.hbm [shape: f32[16,32], index: 17, kind: output, shape index: {}]
  %s18 = sld [smem:[#allocation0]]
  $region78: #{tpu_custom_call.1} parent=0
    _
  %s20 = ssub.s32 1, %s18
  %s21 = scalar_select 0, %s20, %s18
  $region1: #{tpu_custom_call.1} parent=0
    #allocation2 [shape = 'u8[8192]{0}', space=vmem, size = 0x2000, scoped, tag = 'output window, operand 0, single buffered']
    #allocation3 [shape = 's32[1]{0}', space=sflag, size = 0x4, scoped, tag = 'scoped memory for tpu_custom_call.1']
    %22 = vsyncpa [#allocation3], 0
    // Predicated region
    $region2: #{tpu_custom_call.1} parent=1 // pred_check
      _
    $region3: #{tpu_custom_call.1} parent=1 // pred_check_branch
      %24 = sbr.rel (0) target = $region5
    $region4: #{tpu_custom_call.1} parent=1 // pred_region
      _
    $region5: #{tpu_custom_call.1} parent=1 // pred_fallthru
      _
    // Predicated region
    $region6: #{tpu_custom_call.1} parent=1 // pred_check
      _
    $region7: #{tpu_custom_call.1} parent=1 // pred_check_branch
      %26 = sbr.rel (0) target = $region9
    $region8: #{tpu_custom_call.1} parent=1 // pred_region
      _
    $region9: #{tpu_custom_call.1} parent=1 // pred_fallthru
      _
    // Predicated region
    $region10: #{tpu_custom_call.1} parent=1 // pred_check
      _
    $region11: #{tpu_custom_call.1} parent=1 // pred_check_branch
      %28 = sbr.rel (0) target = $region13
    $region12: #{tpu_custom_call.1} parent=1 // pred_region
      _
    $region13: #{tpu_custom_call.1} parent=1 // pred_fallthru
      _
    // Predicated region
    $region14: #{tpu_custom_call.1} parent=1 // pred_check
      _
    $region15: #{tpu_custom_call.1} parent=1 // pred_check_branch
      %30 = sbr.rel (0) target = $region17
    $region16: #{tpu_custom_call.1} parent=1 // pred_region
      _
    $region17: #{tpu_custom_call.1} parent=1 // pred_fallthru
      _
    // Predicated region
    $region18: #{tpu_custom_call.1} parent=1 // pred_check
      _
    $region19: #{tpu_custom_call.1} parent=1 // pred_check_branch
      %32 = sbr.rel (0) target = $region21
    $region20: #{tpu_custom_call.1} parent=1 // pred_region
      _
    $region21: #{tpu_custom_call.1} parent=1 // pred_fallthru
      _
    // Predicated region
    $region22: #{tpu_custom_call.1} parent=1 // pred_check
      _
    $region23: #{tpu_custom_call.1} parent=1 // pred_check_branch
      %34 = sbr.rel (0) target = $region25
    $region24: #{tpu_custom_call.1} parent=1 // pred_region
      _
    $region25: #{tpu_custom_call.1} parent=1 // pred_fallthru
      _
    // Predicated region
    $region26: #{tpu_custom_call.1} parent=1 // pred_check
      _
    $region27: #{tpu_custom_call.1} parent=1 // pred_check_branch
      %36 = sbr.rel (0) target = $region29
    $region28: #{tpu_custom_call.1} parent=1 // pred_region
      _
    $region29: #{tpu_custom_call.1} parent=1 // pred_fallthru
      _
    // Predicated region
    $region30: #{tpu_custom_call.1} parent=1 // pred_check
      _
    $region31: #{tpu_custom_call.1} parent=1 // pred_check_branch
      %38 = sbr.rel (0) target = $region33
    $region32: #{tpu_custom_call.1} parent=1 // pred_region
      _
    $region33: #{tpu_custom_call.1} parent=1 // pred_fallthru
      _
    // Predicated region
    $region34: #{tpu_custom_call.1} parent=1 // pred_check
      _
    $region35: #{tpu_custom_call.1} parent=1 // pred_check_branch
      %40 = sbr.rel (0) target = $region37
    $region36: #{tpu_custom_call.1} parent=1 // pred_region
      _
    $region37: #{tpu_custom_call.1} parent=1 // pred_fallthru
      _
    // Predicated region
    $region38: #{tpu_custom_call.1} parent=1 // pred_check
      _
    $region39: #{tpu_custom_call.1} parent=1 // pred_check_branch
      %42 = sbr.rel (0) target = $region41
    $region40: #{tpu_custom_call.1} parent=1 // pred_region
      _
    $region41: #{tpu_custom_call.1} parent=1 // pred_fallthru
      _
    // Predicated region
    $region42: #{tpu_custom_call.1} parent=1 // pred_check
      _
    $region43: #{tpu_custom_call.1} parent=1 // pred_check_branch
      %44 = sbr.rel (0) target = $region45
    $region44: #{tpu_custom_call.1} parent=1 // pred_region
      _
    $region45: #{tpu_custom_call.1} parent=1 // pred_fallthru
      _
    // Predicated region
    $region46: #{tpu_custom_call.1} parent=1 // pred_check
      _
    $region47: #{tpu_custom_call.1} parent=1 // pred_check_branch
      %46 = sbr.rel (0) target = $region49
    $region48: #{tpu_custom_call.1} parent=1 // pred_region
      _
    $region49: #{tpu_custom_call.1} parent=1 // pred_fallthru
      _
    // Predicated region
    $region50: #{tpu_custom_call.1} parent=1 // pred_check
      _
    $region51: #{tpu_custom_call.1} parent=1 // pred_check_branch
      %48 = sbr.rel (0) target = $region53
    $region52: #{tpu_custom_call.1} parent=1 // pred_region
      _
    $region53: #{tpu_custom_call.1} parent=1 // pred_fallthru
      _
    // Predicated region
    $region54: #{tpu_custom_call.1} parent=1 // pred_check
      _
    $region55: #{tpu_custom_call.1} parent=1 // pred_check_branch
      %50 = sbr.rel (0) target = $region57
    $region56: #{tpu_custom_call.1} parent=1 // pred_region
      _
    $region57: #{tpu_custom_call.1} parent=1 // pred_fallthru
      _
    // Predicated region
    $region58: #{tpu_custom_call.1} parent=1 // pred_check
      _
    $region59: #{tpu_custom_call.1} parent=1 // pred_check_branch
      %52 = sbr.rel (0) target = $region61
    $region60: #{tpu_custom_call.1} parent=1 // pred_region
      _
    $region61: #{tpu_custom_call.1} parent=1 // pred_fallthru
      _
    // Predicated region
    $region62: #{tpu_custom_call.1} parent=1 // pred_check
      _
    $region63: #{tpu_custom_call.1} parent=1 // pred_check_branch
      %54 = sbr.rel (0) target = $region65
    $region64: #{tpu_custom_call.1} parent=1 // pred_region
      _
    $region65: #{tpu_custom_call.1} parent=1 // pred_fallthru
      _
    // Predicated region
    $region66: #{tpu_custom_call.1} parent=1 // pred_check
      _
    $region67: #{tpu_custom_call.1} parent=1 // pred_check_branch
      %56 = sbr.rel (0) target = $region69
    $region68: #{tpu_custom_call.1} parent=1 // pred_region
      _
    $region69: #{tpu_custom_call.1} parent=1 // pred_fallthru
      _
    %v58 = vld [vmem:[%s0] sm:$0xff]
    %v59 = vld [vmem:[%s0 + $0x8] sm:$0xff]
    %v60 = vld [vmem:[%s5] sm:$0x7]
    %v61 = vld [vmem:[%s6] sm:$0x1]
    %v63 = vlaneseq
    %v64 = vshrl.u32 %v63, 7
    %v65 = vsub.s32 0, %v64
    %v66 = vrot.slane %v61, %v65
    %vm68 = vcmask 23552
    %v70 = vsel %vm68, %v58, 0
    %v73 = vsel %vm68, %v59, 0
    %vm75 = vcmask 1042432
    %v77 = vsel %vm75, %v60, 0
    %79 = vmatprep.subr.mxu0 0.0
    %80 = vmatpush1.msra.mxu0 %v77
    %81 = vmatprep.subr.mxu0 0.0
    %82 = vmatpush1.msra.mxu0 0.0
    %83 = vmatprep.subr.mxu0 0.0
    %84 = vmatpush1.msra.mxu0 0.0
    %85 = vmatprep.subr.mxu0 0.0
    %86 = vmatpush1.msra.mxu0 0.0
    %87 = vmatprep.subr.mxu0 0.0
    %88 = vmatpush1.msra.mxu0 0.0
    %89 = vmatprep.subr.mxu0 0.0
    %90 = vmatpush1.msra.mxu0 0.0
    %91 = vmatprep.subr.mxu0 0.0
    %92 = vmatpush1.msra.mxu0 0.0
    %93 = vmatprep.subr.mxu0 0.0
    %94 = vmatpush1.msra.mxu0 0.0
    %95 = vmatprep.subr.mxu0 0.0
    %96 = vmatpush1.msra.mxu0 0.0
    %97 = vmatprep.subr.mxu0 0.0
    %98 = vmatpush1.msra.mxu0 0.0
    %99 = vmatprep.subr.mxu0 0.0
    %100 = vmatpush1.msra.mxu0 0.0
    %101 = vmatprep.subr.mxu0 0.0
    %102 = vmatpush1.msra.mxu0 0.0
    %103 = vmatprep.subr.mxu0 0.0
    %104 = vmatpush1.msra.mxu0 0.0
    %105 = vmatprep.subr.mxu0 0.0
    %106 = vmatpush1.msra.mxu0 0.0
    %107 = vmatprep.subr.mxu0 0.0
    %108 = vmatpush1.msra.mxu0 0.0
    %109 = vmatprep.subr.mxu0 0.0
    %110 = vmatpush1.msra.mxu0 0.0
    %111 = vmatprep.subr.mxu0 0.0
    %112 = vmatpush1.msra.mxu0 0.0
    %113 = vmatprep.subr.mxu0 0.0
    %114 = vmatpush1.msra.mxu0 0.0
    %115 = vmatprep.subr.mxu0 0.0
    %116 = vmatpush1.msra.mxu0 0.0
    %117 = vmatprep.subr.mxu0 0.0
    %118 = vmatpush1.msra.mxu0 0.0
    %119 = vmatprep.subr.mxu0 0.0
    %120 = vmatpush1.msra.mxu0 0.0
    %121 = vmatprep.subr.mxu0 0.0
    %122 = vmatpush1.msra.mxu0 0.0
    %123 = vmatprep.subr.mxu0 0.0
    %124 = vmatpush1.msra.mxu0 0.0
    %125 = vmatprep.subr.mxu0 0.0
    %126 = vmatpush1.msra.mxu0 0.0
    %127 = vmatprep.subr.mxu0 0.0
    %128 = vmatpush1.msra.mxu0 0.0
    %129 = vmatprep.subr.mxu0 0.0
    %130 = vmatpush1.msra.mxu0 0.0
    %131 = vmatprep.subr.mxu0 0.0
    %132 = vmatpush1.msra.mxu0 0.0
    %133 = vmatprep.subr.mxu0 0.0
    %134 = vmatpush1.msra.mxu0 0.0
    %135 = vmatprep.subr.mxu0 0.0
    %136 = vmatpush1.msra.mxu0 0.0
    %137 = vmatprep.subr.mxu0 0.0
    %138 = vmatpush1.msra.mxu0 0.0
    %139 = vmatprep.subr.mxu0 0.0
    %140 = vmatpush1.msra.mxu0 0.0
    %141 = vmatprep.subr.mxu0 0.0
    %142 = vmatpush1.msra.mxu0 0.0
    %143 = vmatprep.mubr.f32.mxu0 0.0
    %144 = vmatmul.mubr.f32.gmra.mrb[0].mxu0 %v70
    %v145 = vpop.f32.mrb[0].mxu0
    %v146 = vadd.f32 %v66, %v145
    %v147 = vpop.f32.mrb[0].mxu0
    %148 = vmatprep.mubr.f32.mxu0 0.0
    %149 = vmatmul.mubr.f32.gmra.mrb[0].mxu0 %v73
    %v150 = vpop.f32.mrb[0].mxu0
    %v151 = vadd.f32 %v66, %v150
    %v152 = vpop.f32.mrb[0].mxu0
    %153 = vdwg.mxu0
    %v154 = vld [vmem:[%s9] sm:$0x1]
    %v155 = vld [vmem:[%s10] sm:$0x1]
    %vm156 = vcmask 261120
    %v157 = vsel %vm156, %v146, 0.0
    %v158 = vsel %vm156, %v151, 0.0
    %v159 = vadd.f32 %v157, %v158
    %v160 = vrot.slane %v159, 4
    %v161 = vadd.f32 %v159, %v160
    %v162 = vrot.slane %v161, 2
    %v163 = vadd.f32 %v161, %v162
    %v164 = vrot.slane %v163, 1
    %v165 = vadd.f32 %v163, %v164
    %v166 = vrcp.pop 16.0
    %v167 = vmul.f32 %v165, %v166
    %v168 = vsub.f32 %v146, %v167
    %v169 = vsub.f32 %v151, %v167
    %v170 = vmul.f32 %v168, %v168
    %v171 = vmul.f32 %v169, %v169
    %v172 = vsel %vm156, %v170, 0.0
    %v173 = vsel %vm156, %v171, 0.0
    %v174 = vadd.f32 %v172, %v173
    %v175 = vrot.slane %v174, 4
    %v176 = vadd.f32 %v174, %v175
    %v177 = vrot.slane %v176, 2
    %v178 = vadd.f32 %v176, %v177
    %v179 = vrot.slane %v178, 1
    %v180 = vadd.f32 %v178, %v179
    %v181 = vmul.f32 %v180, %v166
    %v182 = vadd.f32 %v181, 1e-05
    %v183 = vrsqrt.pop %v182
    %v184 = vmul.f32 %v168, %v183
    %v185 = vmul.f32 %v169, %v183
    %v187 = vlaneseq
    %v188 = vshrl.u32 %v187, 7
    %v189 = vsub.s32 0, %v188
    %v190 = vrot.slane %v154, %v189
    %v192 = vmul.f32 %v184, %v190
    %v193 = vmul.f32 %v185, %v190
    %v195 = vlaneseq
    %v196 = vshrl.u32 %v195, 7
    %v197 = vsub.s32 0, %v196
    %v198 = vrot.slane %v155, %v197
    %v200 = vadd.f32 %v192, %v198
    %v201 = vadd.f32 %v193, %v198
    %v202 = vld [vmem:[%s1] sm:$0xff]
    %v203 = vld [vmem:[%s1 + $0x8] sm:$0xff]
    %v204 = vld [vmem:[%s1 + $0x10] sm:$0xff]
    %v205 = vld [vmem:[%s1 + $0x18] sm:$0xff]
    %v206 = vld [vmem:[%s7] sm:$0x3]
    %v207 = vld [vmem:[%s8] sm:$0x1]
    %v209 = vlaneseq
    %v210 = vshrl.u32 %v209, 7
    %v211 = vsub.s32 0, %v210
    %v212 = vrot.slane %v207, %v211
    %vm214 = vcmask 15360
    %v216 = vsel %vm214, %v202, 0
    %v219 = vsel %vm214, %v203, 0
    %v222 = vsel %vm214, %v204, 0
    %v225 = vsel %vm214, %v205, 0
    %vm227 = vcmask 1041408
    %v229 = vsel %vm227, %v206, 0
    %231 = vmatprep.subr.mxu0 0.0
    %232 = vmatpush1.msra.mxu0 %v229
    %233 = vmatprep.subr.mxu0 0.0
    %234 = vmatpush1.msra.mxu0 0.0
    %235 = vmatprep.subr.mxu0 0.0
    %236 = vmatpush1.msra.mxu0 0.0
    %237 = vmatprep.subr.mxu0 0.0
    %238 = vmatpush1.msra.mxu0 0.0
    %239 = vmatprep.subr.mxu0 0.0
    %240 = vmatpush1.msra.mxu0 0.0
    %241 = vmatprep.subr.mxu0 0.0
    %242 = vmatpush1.msra.mxu0 0.0
    %243 = vmatprep.subr.mxu0 0.0
    %244 = vmatpush1.msra.mxu0 0.0
    %245 = vmatprep.subr.mxu0 0.0
    %246 = vmatpush1.msra.mxu0 0.0
    %247 = vmatprep.subr.mxu0 0.0
    %248 = vmatpush1.msra.mxu0 0.0
    %249 = vmatprep.subr.mxu0 0.0
    %250 = vmatpush1.msra.mxu0 0.0
    %251 = vmatprep.subr.mxu0 0.0
    %252 = vmatpush1.msra.mxu0 0.0
    %253 = vmatprep.subr.mxu0 0.0
    %254 = vmatpush1.msra.mxu0 0.0
    %255 = vmatprep.subr.mxu0 0.0
    %256 = vmatpush1.msra.mxu0 0.0
    %257 = vmatprep.subr.mxu0 0.0
    %258 = vmatpush1.msra.mxu0 0.0
    %259 = vmatprep.subr.mxu0 0.0
    %260 = vmatpush1.msra.mxu0 0.0
    %261 = vmatprep.subr.mxu0 0.0
    %262 = vmatpush1.msra.mxu0 0.0
    %263 = vmatprep.subr.mxu0 0.0
    %264 = vmatpush1.msra.mxu0 0.0
    %265 = vmatprep.subr.mxu0 0.0
    %266 = vmatpush1.msra.mxu0 0.0
    %267 = vmatprep.subr.mxu0 0.0
    %268 = vmatpush1.msra.mxu0 0.0
    %269 = vmatprep.subr.mxu0 0.0
    %270 = vmatpush1.msra.mxu0 0.0
    %271 = vmatprep.subr.mxu0 0.0
    %272 = vmatpush1.msra.mxu0 0.0
    %273 = vmatprep.subr.mxu0 0.0
    %274 = vmatpush1.msra.mxu0 0.0
    %275 = vmatprep.subr.mxu0 0.0
    %276 = vmatpush1.msra.mxu0 0.0
    %277 = vmatprep.subr.mxu0 0.0
    %278 = vmatpush1.msra.mxu0 0.0
    %279 = vmatprep.subr.mxu0 0.0
    %280 = vmatpush1.msra.mxu0 0.0
    %281 = vmatprep.subr.mxu0 0.0
    %282 = vmatpush1.msra.mxu0 0.0
    %283 = vmatprep.subr.mxu0 0.0
    %284 = vmatpush1.msra.mxu0 0.0
    %285 = vmatprep.subr.mxu0 0.0
    %286 = vmatpush1.msra.mxu0 0.0
    %287 = vmatprep.subr.mxu0 0.0
    %288 = vmatpush1.msra.mxu0 0.0
    %289 = vmatprep.subr.mxu0 0.0
    %290 = vmatpush1.msra.mxu0 0.0
    %291 = vmatprep.subr.mxu0 0.0
    %292 = vmatpush1.msra.mxu0 0.0
    %293 = vmatprep.subr.mxu0 0.0
    %294 = vmatpush1.msra.mxu0 0.0
    %295 = vmatprep.mubr.f32.mxu0 0.0
    %296 = vmatmul.mubr.f32.gmra.mrb[0].mxu0 %v216
    %v297 = vpop.f32.mrb[0].mxu0
    %v298 = vadd.f32 %v212, %v297
    %v299 = vpop.f32.mrb[0].mxu0
    %300 = vmatprep.mubr.f32.mxu0 0.0
    %301 = vmatmul.mubr.f32.gmra.mrb[0].mxu0 %v219
    %v302 = vpop.f32.mrb[0].mxu0
    %v303 = vadd.f32 %v212, %v302
    %v304 = vpop.f32.mrb[0].mxu0
    %305 = vmatprep.mubr.f32.mxu0 0.0
    %306 = vmatmul.mubr.f32.gmra.mrb[0].mxu0 %v222
    %v307 = vpop.f32.mrb[0].mxu0
    %v308 = vadd.f32 %v212, %v307
    %v309 = vpop.f32.mrb[0].mxu0
    %310 = vmatprep.mubr.f32.mxu0 0.0
    %311 = vmatmul.mubr.f32.gmra.mrb[0].mxu0 %v225
    %v312 = vpop.f32.mrb[0].mxu0
    %v313 = vadd.f32 %v212, %v312
    %v314 = vpop.f32.mrb[0].mxu0
    %315 = vdwg.mxu0
    %v316 = vld [vmem:[%s11] sm:$0x1]
    %v317 = vld [vmem:[%s12] sm:$0x1]
    %vm318 = vcmask 130048
    %v319 = vsel %vm318, %v298, 0.0
    %v320 = vsel %vm318, %v303, 0.0
    %v321 = vadd.f32 %v319, %v320
    %v322 = vsel %vm318, %v308, 0.0
    %v323 = vadd.f32 %v321, %v322
    %v324 = vsel %vm318, %v313, 0.0
    %v325 = vadd.f32 %v323, %v324
    %v326 = vrot.slane %v325, 4
    %v327 = vadd.f32 %v325, %v326
    %v328 = vrot.slane %v327, 2
    %v329 = vadd.f32 %v327, %v328
    %v330 = vrot.slane %v329, 1
    %v331 = vadd.f32 %v329, %v330
    %v332 = vrcp.pop 32.0
    %v333 = vmul.f32 %v331, %v332
    %v334 = vsub.f32 %v298, %v333
    %v335 = vsub.f32 %v303, %v333
    %v336 = vsub.f32 %v308, %v333
    %v337 = vsub.f32 %v313, %v333
    %v338 = vmul.f32 %v334, %v334
    %v339 = vmul.f32 %v335, %v335
    %v340 = vmul.f32 %v336, %v336
    %v341 = vmul.f32 %v337, %v337
    %v342 = vsel %vm318, %v338, 0.0
    %v343 = vsel %vm318, %v339, 0.0
    %v344 = vadd.f32 %v342, %v343
    %v345 = vsel %vm318, %v340, 0.0
    %v346 = vadd.f32 %v344, %v345
    %v347 = vsel %vm318, %v341, 0.0
    %v348 = vadd.f32 %v346, %v347
    %v349 = vrot.slane %v348, 4
    %v350 = vadd.f32 %v348, %v349
    %v351 = vrot.slane %v350, 2
    %v352 = vadd.f32 %v350, %v351
    %v353 = vrot.slane %v352, 1
    %v354 = vadd.f32 %v352, %v353
    %v355 = vmul.f32 %v354, %v332
    %v356 = vadd.f32 %v355, 1e-05
    %v357 = vrsqrt.pop %v356
    %v358 = vmul.f32 %v334, %v357
    %v359 = vmul.f32 %v335, %v357
    %v360 = vmul.f32 %v336, %v357
    %v361 = vmul.f32 %v337, %v357
    %v363 = vlaneseq
    %v364 = vshrl.u32 %v363, 7
    %v365 = vsub.s32 0, %v364
    %v366 = vrot.slane %v316, %v365
    %v368 = vmul.f32 %v358, %v366
    %v369 = vmul.f32 %v359, %v366
    %v370 = vmul.f32 %v360, %v366
    %v371 = vmul.f32 %v361, %v366
    %v373 = vlaneseq
    %v374 = vshrl.u32 %v373, 7
    %v375 = vsub.s32 0, %v374
    %v376 = vrot.slane %v317, %v375
    %v378 = vadd.f32 %v368, %v376
    %v379 = vadd.f32 %v369, %v376
    %v380 = vadd.f32 %v370, %v376
    %v381 = vadd.f32 %v371, %v376
    %v382 = vld [vmem:[%s2] sm:$0xf]
    %v383 = vld [vmem:[%s2 + $0x4] sm:$0xf]
    %v384 = vld [vmem:[%s2 + $0x8] sm:$0xf]
    %v385 = vld [vmem:[%s2 + $0xc] sm:$0xf]
    %v386 = vld [vmem:[%s3] sm:$0xf]
    %v387 = vld [vmem:[%s3 + $0x4] sm:$0xf]
    %v388 = vld [vmem:[%s3 + $0x8] sm:$0xf]
    %v389 = vld [vmem:[%s3 + $0xc] sm:$0xf]
    %v390 = vld [vmem:[%s4] sm:$0xf]
    %v391 = vld [vmem:[%s4 + $0x4] sm:$0xf]
    %v392 = vld [vmem:[%s15 + $0x40] sm:$0xff]
    %v393 = vld [vmem:[%s15 + $0x48] sm:$0xff]
    %s394 = scalar_lea.vmem %s15, 80
    %v395 = vld [vmem:[%s394 + $0x40] sm:$0xff]
    %v396 = vld [vmem:[%s394 + $0x48] sm:$0xff]
    %s397 = scalar_lea.vmem %s15, 160
    %v398 = vld [vmem:[%s397 + $0x40] sm:$0xff]
    %v399 = vld [vmem:[%s397 + $0x48] sm:$0xff]
    %402 = vrot.lane.b32.xlu0 %v395, 32
    %v403 = vpop.permute.xlu0 %402
    %404 = vrot.lane.b32.xlu0 %v396, 32
    %v405 = vpop.permute.xlu0 %404
    %410 = vrot.lane.b32.xlu0 %v398, 64
    %v411 = vpop.permute.xlu0 %410
    %412 = vrot.lane.b32.xlu0 %v399, 64
    %v413 = vpop.permute.xlu0 %412
    %v416 = vsel %vm156, %v392, %v403
    %v417 = vsel %vm156, %v393, %v405
    %vm418 = vcmask 523264
    %v419 = vsel %vm418, %v416, %v411
    %v420 = vsel %vm418, %v417, %v413
    %v422 = vsel %vm318, %v378, 0
    %v425 = vsel %vm318, %v379, 0
    %v428 = vsel %vm318, %v380, 0
    %v431 = vsel %vm318, %v381, 0
    %433 = vmatprep.subr.mxu0 0.0
    %434 = vmatpush1.msra.mxu0 %v419
    %435 = vmatprep.subr.mxu0 0.0
    %436 = vmatpush1.msra.mxu0 %v420
    %437 = vmatprep.subr.mxu0 0.0
    %438 = vmatpush1.msra.mxu0 0.0
    %439 = vmatprep.subr.mxu0 0.0
    %440 = vmatpush1.msra.mxu0 0.0
    %441 = vmatprep.subr.mxu0 0.0
    %442 = vmatpush1.msra.mxu0 0.0
    %443 = vmatprep.subr.mxu0 0.0
    %444 = vmatpush1.msra.mxu0 0.0
    %445 = vmatprep.subr.mxu0 0.0
    %446 = vmatpush1.msra.mxu0 0.0
    %447 = vmatprep.subr.mxu0 0.0
    %448 = vmatpush1.msra.mxu0 0.0
    %449 = vmatprep.subr.mxu0 0.0
    %450 = vmatpush1.msra.mxu0 0.0
    %451 = vmatprep.subr.mxu0 0.0
    %452 = vmatpush1.msra.mxu0 0.0
    %453 = vmatprep.subr.mxu0 0.0
    %454 = vmatpush1.msra.mxu0 0.0
    %455 = vmatprep.subr.mxu0 0.0
    %456 = vmatpush1.msra.mxu0 0.0
    %457 = vmatprep.subr.mxu0 0.0
    %458 = vmatpush1.msra.mxu0 0.0
    %459 = vmatprep.subr.mxu0 0.0
    %460 = vmatpush1.msra.mxu0 0.0
    %461 = vmatprep.subr.mxu0 0.0
    %462 = vmatpush1.msra.mxu0 0.0
    %463 = vmatprep.subr.mxu0 0.0
    %464 = vmatpush1.msra.mxu0 0.0
    %465 = vmatprep.subr.mxu0 0.0
    %466 = vmatpush1.msra.mxu0 0.0
    %467 = vmatprep.subr.mxu0 0.0
    %468 = vmatpush1.msra.mxu0 0.0
    %469 = vmatprep.subr.mxu0 0.0
    %470 = vmatpush1.msra.mxu0 0.0
    %471 = vmatprep.subr.mxu0 0.0
    %472 = vmatpush1.msra.mxu0 0.0
    %473 = vmatprep.subr.mxu0 0.0
    %474 = vmatpush1.msra.mxu0 0.0
    %475 = vmatprep.subr.mxu0 0.0
    %476 = vmatpush1.msra.mxu0 0.0
    %477 = vmatprep.subr.mxu0 0.0
    %478 = vmatpush1.msra.mxu0 0.0
    %479 = vmatprep.subr.mxu0 0.0
    %480 = vmatpush1.msra.mxu0 0.0
    %481 = vmatprep.subr.mxu0 0.0
    %482 = vmatpush1.msra.mxu0 0.0
    %483 = vmatprep.subr.mxu0 0.0
    %484 = vmatpush1.msra.mxu0 0.0
    %485 = vmatprep.subr.mxu0 0.0
    %486 = vmatpush1.msra.mxu0 0.0
    %487 = vmatprep.subr.mxu0 0.0
    %488 = vmatpush1.msra.mxu0 0.0
    %489 = vmatprep.subr.mxu0 0.0
    %490 = vmatpush1.msra.mxu0 0.0
    %491 = vmatprep.subr.mxu0 0.0
    %492 = vmatpush1.msra.mxu0 0.0
    %493 = vmatprep.subr.mxu0 0.0
    %494 = vmatpush1.msra.mxu0 0.0
    %495 = vmatprep.subr.mxu0 0.0
    %496 = vmatpush1.msra.mxu0 0.0
    %497 = vmatprep.mubr.f32.mxu0 0.0
    %498 = vmatmul.mubr.f32.gmra.mrb[0].mxu0 %v422
    %v499 = vpop.f32.mrb[0].mxu0
    %v500 = vadd.f32 0.0, %v499
    %v501 = vpop.f32.mrb[0].mxu0
    %502 = vmatprep.mubr.f32.mxu0 0.0
    %503 = vmatmul.mubr.f32.gmra.mrb[0].mxu0 %v425
    %v504 = vpop.f32.mrb[0].mxu0
    %v505 = vadd.f32 0.0, %v504
    %v506 = vpop.f32.mrb[0].mxu0
    %507 = vmatprep.mubr.f32.mxu0 0.0
    %508 = vmatmul.mubr.f32.gmra.mrb[0].mxu0 %v428
    %v509 = vpop.f32.mrb[0].mxu0
    %v510 = vadd.f32 0.0, %v509
    %v511 = vpop.f32.mrb[0].mxu0
    %512 = vmatprep.mubr.f32.mxu0 0.0
    %513 = vmatmul.mubr.f32.gmra.mrb[0].mxu0 %v431
    %v514 = vpop.f32.mrb[0].mxu0
    %v515 = vadd.f32 0.0, %v514
    %v516 = vpop.f32.mrb[0].mxu0
    %517 = vdwg.mxu0
    %v518 = vld [vmem:[%s15] sm:$0xff]
    %v519 = vld [vmem:[%s15 + $0x8] sm:$0xff]
    %v520 = vld [vmem:[%s15 + $0x10] sm:$0xff]
    %v521 = vld [vmem:[%s15 + $0x18] sm:$0xff]
    %v522 = vld [vmem:[%s15 + $0x20] sm:$0xff]
    %v523 = vld [vmem:[%s15 + $0x28] sm:$0xff]
    %v524 = vld [vmem:[%s15 + $0x30] sm:$0xff]
    %v525 = vld [vmem:[%s15 + $0x38] sm:$0xff]
    %v526 = vld [vmem:[%s13] sm:$0xff]
    %v527 = vld [vmem:[%s13 + $0x8] sm:$0xff]
    %v528 = vld [vmem:[%s13 + $0x10] sm:$0xff]
    %v529 = vld [vmem:[%s13 + $0x18] sm:$0xff]
    %v530 = vld [vmem:[%s14] sm:$0x1]
    %v532 = vlaneseq
    %v533 = vshrl.u32 %v532, 7
    %v534 = vsub.s32 0, %v533
    %v535 = vrot.slane %v530, %v534
    %v538 = vsel %vm156, %v200, 0
    %v541 = vsel %vm156, %v201, 0
    %543 = vmatprep.subr.mxu0 0.0
    %544 = vmatpush1.msra.mxu0 %v526
    %545 = vmatprep.subr.mxu0 0.0
    %546 = vmatpush1.msra.mxu0 %v527
    %547 = vmatprep.subr.mxu0 0.0
    %548 = vmatpush1.msra.mxu0 %v528
    %549 = vmatprep.subr.mxu0 0.0
    %550 = vmatpush1.msra.mxu0 %v529
    %551 = vmatprep.subr.mxu0 0.0
    %552 = vmatpush1.msra.mxu0 0.0
    %553 = vmatprep.subr.mxu0 0.0
    %554 = vmatpush1.msra.mxu0 0.0
    %555 = vmatprep.subr.mxu0 0.0
    %556 = vmatpush1.msra.mxu0 0.0
    %557 = vmatprep.subr.mxu0 0.0
    %558 = vmatpush1.msra.mxu0 0.0
    %559 = vmatprep.subr.mxu0 0.0
    %560 = vmatpush1.msra.mxu0 0.0
    %561 = vmatprep.subr.mxu0 0.0
    %562 = vmatpush1.msra.mxu0 0.0
    %563 = vmatprep.subr.mxu0 0.0
    %564 = vmatpush1.msra.mxu0 0.0
    %565 = vmatprep.subr.mxu0 0.0
    %566 = vmatpush1.msra.mxu0 0.0
    %567 = vmatprep.subr.mxu0 0.0
    %568 = vmatpush1.msra.mxu0 0.0
    %569 = vmatprep.subr.mxu0 0.0
    %570 = vmatpush1.msra.mxu0 0.0
    %571 = vmatprep.subr.mxu0 0.0
    %572 = vmatpush1.msra.mxu0 0.0
    %573 = vmatprep.subr.mxu0 0.0
    %574 = vmatpush1.msra.mxu0 0.0
    %575 = vmatprep.subr.mxu0 0.0
    %576 = vmatpush1.msra.mxu0 0.0
    %577 = vmatprep.subr.mxu0 0.0
    %578 = vmatpush1.msra.mxu0 0.0
    %579 = vmatprep.subr.mxu0 0.0
    %580 = vmatpush1.msra.mxu0 0.0
    %581 = vmatprep.subr.mxu0 0.0
    %582 = vmatpush1.msra.mxu0 0.0
    %583 = vmatprep.subr.mxu0 0.0
    %584 = vmatpush1.msra.mxu0 0.0
    %585 = vmatprep.subr.mxu0 0.0
    %586 = vmatpush1.msra.mxu0 0.0
    %587 = vmatprep.subr.mxu0 0.0
    %588 = vmatpush1.msra.mxu0 0.0
    %589 = vmatprep.subr.mxu0 0.0
    %590 = vmatpush1.msra.mxu0 0.0
    %591 = vmatprep.subr.mxu0 0.0
    %592 = vmatpush1.msra.mxu0 0.0
    %593 = vmatprep.subr.mxu0 0.0
    %594 = vmatpush1.msra.mxu0 0.0
    %595 = vmatprep.subr.mxu0 0.0
    %596 = vmatpush1.msra.mxu0 0.0
    %597 = vmatprep.subr.mxu0 0.0
    %598 = vmatpush1.msra.mxu0 0.0
    %599 = vmatprep.subr.mxu0 0.0
    %600 = vmatpush1.msra.mxu0 0.0
    %601 = vmatprep.subr.mxu0 0.0
    %602 = vmatpush1.msra.mxu0 0.0
    %603 = vmatprep.subr.mxu0 0.0
    %604 = vmatpush1.msra.mxu0 0.0
    %605 = vmatprep.subr.mxu0 0.0
    %606 = vmatpush1.msra.mxu0 0.0
    %607 = vmatprep.mubr.f32.mxu0 0.0
    %608 = vmatmul.mubr.f32.gmra.mrb[0].mxu0 %v538
    %v609 = vpop.f32.mrb[0].mxu0
    %v610 = vadd.f32 %v535, %v609
    %v611 = vpop.f32.mrb[0].mxu0
    %612 = vmatprep.mubr.f32.mxu0 0.0
    %613 = vmatmul.mubr.f32.gmra.mrb[0].mxu0 %v541
    %v614 = vpop.f32.mrb[0].mxu0
    %v615 = vadd.f32 %v535, %v614
    %v616 = vpop.f32.mrb[0].mxu0
    %617 = vdwg.mxu0
    %v619 = vsel %vm156, %v610, 0
    %v622 = vsel %vm156, %v615, 0
    %624 = vmatprep.subr.mxu0 0.0
    %625 = vmatpush1.msra.mxu0 %v518
    %626 = vmatprep.subr.mxu0 0.0
    %627 = vmatpush1.msra.mxu0 %v519
    %628 = vmatprep.subr.mxu0 0.0
    %629 = vmatpush1.msra.mxu0 %v520
    %630 = vmatprep.subr.mxu0 0.0
    %631 = vmatpush1.msra.mxu0 %v521
    %632 = vmatprep.subr.mxu0 0.0
    %633 = vmatpush1.msra.mxu0 0.0
    %634 = vmatprep.subr.mxu0 0.0
    %635 = vmatpush1.msra.mxu0 0.0
    %636 = vmatprep.subr.mxu0 0.0
    %637 = vmatpush1.msra.mxu0 0.0
    %638 = vmatprep.subr.mxu0 0.0
    %639 = vmatpush1.msra.mxu0 0.0
    %640 = vmatprep.subr.mxu0 0.0
    %641 = vmatpush1.msra.mxu0 0.0
    %642 = vmatprep.subr.mxu0 0.0
    %643 = vmatpush1.msra.mxu0 0.0
    %644 = vmatprep.subr.mxu0 0.0
    %645 = vmatpush1.msra.mxu0 0.0
    %646 = vmatprep.subr.mxu0 0.0
    %647 = vmatpush1.msra.mxu0 0.0
    %648 = vmatprep.subr.mxu0 0.0
    %649 = vmatpush1.msra.mxu0 0.0
    %650 = vmatprep.subr.mxu0 0.0
    %651 = vmatpush1.msra.mxu0 0.0
    %652 = vmatprep.subr.mxu0 0.0
    %653 = vmatpush1.msra.mxu0 0.0
    %654 = vmatprep.subr.mxu0 0.0
    %655 = vmatpush1.msra.mxu0 0.0
    %656 = vmatprep.subr.mxu0 0.0
    %657 = vmatpush1.msra.mxu0 0.0
    %658 = vmatprep.subr.mxu0 0.0
    %659 = vmatpush1.msra.mxu0 0.0
    %660 = vmatprep.subr.mxu0 0.0
    %661 = vmatpush1.msra.mxu0 0.0
    %662 = vmatprep.subr.mxu0 0.0
    %663 = vmatpush1.msra.mxu0 0.0
    %664 = vmatprep.subr.mxu0 0.0
    %665 = vmatpush1.msra.mxu0 0.0
    %666 = vmatprep.subr.mxu0 0.0
    %667 = vmatpush1.msra.mxu0 0.0
    %668 = vmatprep.subr.mxu0 0.0
    %669 = vmatpush1.msra.mxu0 0.0
    %670 = vmatprep.subr.mxu0 0.0
    %671 = vmatpush1.msra.mxu0 0.0
    %672 = vmatprep.subr.mxu0 0.0
    %673 = vmatpush1.msra.mxu0 0.0
    %674 = vmatprep.subr.mxu0 0.0
    %675 = vmatpush1.msra.mxu0 0.0
    %676 = vmatprep.subr.mxu0 0.0
    %677 = vmatpush1.msra.mxu0 0.0
    %678 = vmatprep.subr.mxu0 0.0
    %679 = vmatpush1.msra.mxu0 0.0
    %680 = vmatprep.subr.mxu0 0.0
    %681 = vmatpush1.msra.mxu0 0.0
    %682 = vmatprep.subr.mxu0 0.0
    %683 = vmatpush1.msra.mxu0 0.0
    %684 = vmatprep.subr.mxu0 0.0
    %685 = vmatpush1.msra.mxu0 0.0
    %686 = vmatprep.subr.mxu0 0.0
    %687 = vmatpush1.msra.mxu0 0.0
    %688 = vmatprep.mubr.f32.mxu0 0.0
    %689 = vmatmul.mubr.f32.gmra.mrb[0].mxu0 %v619
    %v690 = vpop.f32.mrb[0].mxu0
    %v691 = vadd.f32 0.0, %v690
    %v692 = vpop.f32.mrb[0].mxu0
    %693 = vmatprep.mubr.f32.mxu0 0.0
    %694 = vmatmul.mubr.f32.gmra.mrb[0].mxu0 %v622
    %v695 = vpop.f32.mrb[0].mxu0
    %v696 = vadd.f32 0.0, %v695
    %v697 = vpop.f32.mrb[0].mxu0
    %698 = vdwg.mxu0
    %699 = vmatprep.subr.mxu0 0.0
    %700 = vmatpush1.msra.mxu0 %v522
    %701 = vmatprep.subr.mxu0 0.0
    %702 = vmatpush1.msra.mxu0 %v523
    %703 = vmatprep.subr.mxu0 0.0
    %704 = vmatpush1.msra.mxu0 %v524
    %705 = vmatprep.subr.mxu0 0.0
    %706 = vmatpush1.msra.mxu0 %v525
    %707 = vmatprep.subr.mxu0 0.0
    %708 = vmatpush1.msra.mxu0 0.0
    %709 = vmatprep.subr.mxu0 0.0
    %710 = vmatpush1.msra.mxu0 0.0
    %711 = vmatprep.subr.mxu0 0.0
    %712 = vmatpush1.msra.mxu0 0.0
    %713 = vmatprep.subr.mxu0 0.0
    %714 = vmatpush1.msra.mxu0 0.0
    %715 = vmatprep.subr.mxu0 0.0
    %716 = vmatpush1.msra.mxu0 0.0
    %717 = vmatprep.subr.mxu0 0.0
    %718 = vmatpush1.msra.mxu0 0.0
    %719 = vmatprep.subr.mxu0 0.0
    %720 = vmatpush1.msra.mxu0 0.0
    %721 = vmatprep.subr.mxu0 0.0
    %722 = vmatpush1.msra.mxu0 0.0
    %723 = vmatprep.subr.mxu0 0.0
    %724 = vmatpush1.msra.mxu0 0.0
    %725 = vmatprep.subr.mxu0 0.0
    %726 = vmatpush1.msra.mxu0 0.0
    %727 = vmatprep.subr.mxu0 0.0
    %728 = vmatpush1.msra.mxu0 0.0
    %729 = vmatprep.subr.mxu0 0.0
    %730 = vmatpush1.msra.mxu0 0.0
    %731 = vmatprep.subr.mxu0 0.0
    %732 = vmatpush1.msra.mxu0 0.0
    %733 = vmatprep.subr.mxu0 0.0
    %734 = vmatpush1.msra.mxu0 0.0
    %735 = vmatprep.subr.mxu0 0.0
    %736 = vmatpush1.msra.mxu0 0.0
    %737 = vmatprep.subr.mxu0 0.0
    %738 = vmatpush1.msra.mxu0 0.0
    %739 = vmatprep.subr.mxu0 0.0
    %740 = vmatpush1.msra.mxu0 0.0
    %741 = vmatprep.subr.mxu0 0.0
    %742 = vmatpush1.msra.mxu0 0.0
    %743 = vmatprep.subr.mxu0 0.0
    %744 = vmatpush1.msra.mxu0 0.0
    %745 = vmatprep.subr.mxu0 0.0
    %746 = vmatpush1.msra.mxu0 0.0
    %747 = vmatprep.subr.mxu0 0.0
    %748 = vmatpush1.msra.mxu0 0.0
    %749 = vmatprep.subr.mxu0 0.0
    %750 = vmatpush1.msra.mxu0 0.0
    %751 = vmatprep.subr.mxu0 0.0
    %752 = vmatpush1.msra.mxu0 0.0
    %753 = vmatprep.subr.mxu0 0.0
    %754 = vmatpush1.msra.mxu0 0.0
    %755 = vmatprep.subr.mxu0 0.0
    %756 = vmatpush1.msra.mxu0 0.0
    %757 = vmatprep.subr.mxu0 0.0
    %758 = vmatpush1.msra.mxu0 0.0
    %759 = vmatprep.subr.mxu0 0.0
    %760 = vmatpush1.msra.mxu0 0.0
    %761 = vmatprep.subr.mxu0 0.0
    %762 = vmatpush1.msra.mxu0 0.0
    %763 = vmatprep.mubr.f32.mxu0 0.0
    %764 = vmatmul.mubr.f32.gmra.mrb[0].mxu0 %v619
    %v765 = vpop.f32.mrb[0].mxu0
    %v766 = vadd.f32 0.0, %v765
    %v767 = vpop.f32.mrb[0].mxu0
    %768 = vmatprep.mubr.f32.mxu0 0.0
    %769 = vmatmul.mubr.f32.gmra.mrb[0].mxu0 %v622
    %v770 = vpop.f32.mrb[0].mxu0
    %v771 = vadd.f32 0.0, %v770
    %v772 = vpop.f32.mrb[0].mxu0
    %773 = vdwg.mxu0
    %v774 = vpack.c.bf16 %v615, %v610
    %v775 = vunpack.c.l.bf16 %v774
    %v776 = vunpack.c.h.bf16 %v774
    %v777 = vsub.f32 %v610, %v775
    %v778 = vsub.f32 %v615, %v776
    %v779 = vpack.c.bf16 %v778, %v777
    %v780 = vpack.c.bf16 %v771, %v766
    %v781 = vunpack.c.l.bf16 %v780
    %v782 = vunpack.c.h.bf16 %v780
    %v783 = vsub.f32 %v766, %v781
    %v784 = vsub.f32 %v771, %v782
    %v785 = vpack.c.bf16 %v784, %v783
    %v786 = vpack.c.bf16 %v696, %v691
    %v787 = vunpack.c.l.bf16 %v786
    %v788 = vunpack.c.h.bf16 %v786
    %v789 = vsub.f32 %v691, %v787
    %v790 = vsub.f32 %v696, %v788
    %v791 = vpack.c.bf16 %v790, %v789
    %793 = vrot.lane.b32.xlu0 %v779, 32
    %v794 = vpop.permute.xlu0 %793
    %796 = vrot.lane.b32.xlu0 %v780, 64
    %v797 = vpop.permute.xlu0 %796
    %799 = vrot.lane.b32.xlu0 %v785, 96
    %v800 = vpop.permute.xlu0 %799
    %v803 = vsel %vm156, %v774, %v794
    %v805 = vsel %vm418, %v803, %v797
    %vm806 = vcmask 785408
    %v808 = vsel %vm806, %v805, %v800
    %811 = vrot.lane.b32.xlu0 %v791, 32
    %v812 = vpop.permute.xlu0 %811
    %v815 = vsel %vm156, %v786, %v812
    %v821 = vunpack.c.l.b16 %v382
    %v822 = vunpack.c.l.b16 %v383
    %v823 = vunpack.c.l.b16 %v384
    %v824 = vunpack.c.l.b16 %v385
    %v825 = vpack.c.b16 %v822, %v821
    %v826 = vpack.c.b16 %v824, %v823
    %v828 = vsel %vm318, %v825, 0
    %v831 = vsel %vm318, %v826, 0
    %833 = vmatprep.subr.bf16.mxu0 0
    %834 = vmatpush1.bf16.msra.mxu0 %v808
    %835 = vmatprep.subr.bf16.mxu0 0
    %836 = vmatpush1.bf16.msra.mxu0 0
    %837 = vmatprep.subr.bf16.mxu0 0
    %838 = vmatpush1.bf16.msra.mxu0 0
    %839 = vmatprep.subr.bf16.mxu0 0
    %840 = vmatpush1.bf16.msra.mxu0 0
    %841 = vmatprep.subr.bf16.mxu0 0
    %842 = vmatpush1.bf16.msra.mxu0 0
    %843 = vmatprep.subr.bf16.mxu0 0
    %844 = vmatpush1.bf16.msra.mxu0 0
    %845 = vmatprep.subr.bf16.mxu0 0
    %846 = vmatpush1.bf16.msra.mxu0 0
    %847 = vmatprep.subr.bf16.mxu0 0
    %848 = vmatpush1.bf16.msra.mxu0 0
    %849 = vmatprep.subr.bf16.mxu0 0
    %850 = vmatpush1.bf16.msra.mxu0 0
    %851 = vmatprep.subr.bf16.mxu0 0
    %852 = vmatpush1.bf16.msra.mxu0 0
    %853 = vmatprep.subr.bf16.mxu0 0
    %854 = vmatpush1.bf16.msra.mxu0 0
    %855 = vmatprep.subr.bf16.mxu0 0
    %856 = vmatpush1.bf16.msra.mxu0 0
    %857 = vmatprep.subr.bf16.mxu0 0
    %858 = vmatpush1.bf16.msra.mxu0 0
    %859 = vmatprep.subr.bf16.mxu0 0
    %860 = vmatpush1.bf16.msra.mxu0 0
    %861 = vmatprep.subr.bf16.mxu0 0
    %862 = vmatpush1.bf16.msra.mxu0 0
    %863 = vmatprep.subr.bf16.mxu0 0
    %864 = vmatpush1.bf16.msra.mxu0 0
    %865 = vmatprep.mubr.bf16.mxu0 0
    %866 = vmatmul.mubr.bf16.gmra.mrb[0].mxu0 %v828
    %v867 = vpop.f32.mrb[0].mxu0
    %v868 = vadd.f32 0.0, %v867
    %v869 = vpop.f32.mrb[0].mxu0
    %v870 = vpop.f32.mrb[0].mxu0
    %v871 = vadd.f32 0.0, %v870
    %v872 = vpop.f32.mrb[0].mxu0
    %873 = vmatprep.mubr.bf16.mxu0 0
    %874 = vmatmul.mubr.bf16.gmra.mrb[0].mxu0 %v831
    %v875 = vpop.f32.mrb[0].mxu0
    %v876 = vadd.f32 0.0, %v875
    %v877 = vpop.f32.mrb[0].mxu0
    %v878 = vpop.f32.mrb[0].mxu0
    %v879 = vadd.f32 0.0, %v878
    %v880 = vpop.f32.mrb[0].mxu0
    %881 = vdwg.mxu0
    %886 = vrot.lane.b32.xlu0 %v868, 96
    %v887 = vpop.permute.xlu0 %886
    %888 = vrot.lane.b32.xlu0 %v871, 96
    %v889 = vpop.permute.xlu0 %888
    %890 = vrot.lane.b32.xlu0 %v876, 96
    %v891 = vpop.permute.xlu0 %890
    %892 = vrot.lane.b32.xlu0 %v879, 96
    %v893 = vpop.permute.xlu0 %892
    %v898 = vadd.f32 %v868, %v887
    %v899 = vadd.f32 %v871, %v889
    %v900 = vadd.f32 %v876, %v891
    %v901 = vadd.f32 %v879, %v893
    %v906 = vunpack.c.l.b16 %v386
    %v907 = vunpack.c.l.b16 %v387
    %v908 = vunpack.c.l.b16 %v388
    %v909 = vunpack.c.l.b16 %v389
    %v910 = vpack.c.b16 %v907, %v906
    %v911 = vpack.c.b16 %v909, %v908
    %v913 = vsel %vm318, %v910, 0
    %v916 = vsel %vm318, %v911, 0
    %918 = vmatprep.subr.bf16.mxu0 0
    %919 = vmatpush1.bf16.msra.mxu0 %v815
    %920 = vmatprep.subr.bf16.mxu0 0
    %921 = vmatpush1.bf16.msra.mxu0 0
    %922 = vmatprep.subr.bf16.mxu0 0
    %923 = vmatpush1.bf16.msra.mxu0 0
    %924 = vmatprep.subr.bf16.mxu0 0
    %925 = vmatpush1.bf16.msra.mxu0 0
    %926 = vmatprep.subr.bf16.mxu0 0
    %927 = vmatpush1.bf16.msra.mxu0 0
    %928 = vmatprep.subr.bf16.mxu0 0
    %929 = vmatpush1.bf16.msra.mxu0 0
    %930 = vmatprep.subr.bf16.mxu0 0
    %931 = vmatpush1.bf16.msra.mxu0 0
    %932 = vmatprep.subr.bf16.mxu0 0
    %933 = vmatpush1.bf16.msra.mxu0 0
    %934 = vmatprep.subr.bf16.mxu0 0
    %935 = vmatpush1.bf16.msra.mxu0 0
    %936 = vmatprep.subr.bf16.mxu0 0
    %937 = vmatpush1.bf16.msra.mxu0 0
    %938 = vmatprep.subr.bf16.mxu0 0
    %939 = vmatpush1.bf16.msra.mxu0 0
    %940 = vmatprep.subr.bf16.mxu0 0
    %941 = vmatpush1.bf16.msra.mxu0 0
    %942 = vmatprep.subr.bf16.mxu0 0
    %943 = vmatpush1.bf16.msra.mxu0 0
    %944 = vmatprep.subr.bf16.mxu0 0
    %945 = vmatpush1.bf16.msra.mxu0 0
    %946 = vmatprep.subr.bf16.mxu0 0
    %947 = vmatpush1.bf16.msra.mxu0 0
    %948 = vmatprep.subr.bf16.mxu0 0
    %949 = vmatpush1.bf16.msra.mxu0 0
    %950 = vmatprep.mubr.bf16.mxu0 0
    %951 = vmatmul.mubr.bf16.gmra.mrb[0].mxu0 %v913
    %v952 = vpop.f32.mrb[0].mxu0
    %v953 = vadd.f32 0.0, %v952
    %v954 = vpop.f32.mrb[0].mxu0
    %v955 = vpop.f32.mrb[0].mxu0
    %v956 = vadd.f32 0.0, %v955
    %v957 = vpop.f32.mrb[0].mxu0
    %958 = vmatprep.mubr.bf16.mxu0 0
    %959 = vmatmul.mubr.bf16.gmra.mrb[0].mxu0 %v916
    %v960 = vpop.f32.mrb[0].mxu0
    %v961 = vadd.f32 0.0, %v960
    %v962 = vpop.f32.mrb[0].mxu0
    %v963 = vpop.f32.mrb[0].mxu0
    %v964 = vadd.f32 0.0, %v963
    %v965 = vpop.f32.mrb[0].mxu0
    %966 = vdwg.mxu0
    %971 = vrot.lane.b32.xlu0 %v953, 96
    %v972 = vpop.permute.xlu0 %971
    %973 = vrot.lane.b32.xlu0 %v956, 96
    %v974 = vpop.permute.xlu0 %973
    %975 = vrot.lane.b32.xlu0 %v961, 96
    %v976 = vpop.permute.xlu0 %975
    %977 = vrot.lane.b32.xlu0 %v964, 96
    %v978 = vpop.permute.xlu0 %977
    %v983 = vadd.f32 %v953, %v972
    %v984 = vadd.f32 %v956, %v974
    %v985 = vadd.f32 %v961, %v976
    %v986 = vadd.f32 %v964, %v978
    %991 = vrot.lane.b32.xlu0 %v898, 64
    %v992 = vpop.permute.xlu0 %991
    %993 = vrot.lane.b32.xlu0 %v899, 64
    %v994 = vpop.permute.xlu0 %993
    %995 = vrot.lane.b32.xlu0 %v900, 64
    %v996 = vpop.permute.xlu0 %995
    %997 = vrot.lane.b32.xlu0 %v901, 64
    %v998 = vpop.permute.xlu0 %997
    %v1003 = vadd.f32 %v983, %v992
    %v1004 = vadd.f32 %v984, %v994
    %v1005 = vadd.f32 %v985, %v996
    %v1006 = vadd.f32 %v986, %v998
    %v1007 = vadd.f32 %v1003, %v500
    %v1008 = vadd.f32 %v1004, %v505
    %v1009 = vadd.f32 %v1005, %v510
    %v1010 = vadd.f32 %v1006, %v515
    %v1011 = vld [vmem:[%s16] sm:$0x1]
    %v1013 = vlaneseq
    %v1014 = vshrl.u32 %v1013, 7
    %v1015 = vsub.s32 0, %v1014
    %v1016 = vrot.slane %v1011, %v1015
    %v1018 = vadd.f32 %v1007, %v1016
    %v1019 = vadd.f32 %v1008, %v1016
    %v1020 = vadd.f32 %v1009, %v1016
    %v1021 = vadd.f32 %v1010, %v1016
    %vm1022 = vcmp.gt.f32.partialorder %v1018, 0.0
    %vm1023 = vcmp.gt.f32.partialorder %v1019, 0.0
    %vm1024 = vcmp.gt.f32.partialorder %v1020, 0.0
    %vm1025 = vcmp.gt.f32.partialorder %v1021, 0.0
    %v1026 = vmul.f32 %v1018, 0.2
    %v1027 = vmul.f32 %v1019, 0.2
    %v1028 = vmul.f32 %v1020, 0.2
    %v1029 = vmul.f32 %v1021, 0.2
    %v1030 = vsel %vm1022, %v1018, %v1026
    %v1031 = vsel %vm1023, %v1019, %v1027
    %v1032 = vsel %vm1024, %v1020, %v1028
    %v1033 = vsel %vm1025, %v1021, %v1029
    %v1034 = vsel %vm156, %v1030, -inf
    %v1035 = vsel %vm156, %v1031, -inf
    %v1036 = vsel %vm156, %v1032, -inf
    %v1037 = vsel %vm156, %v1033, -inf
    %v1038 = vmax.f32 %v1034, %v1035
    %v1039 = vmax.f32 %v1036, %v1037
    %v1040 = vmax.f32 %v1038, %v1039
    %v1041 = vrot.slane %v1040, 4
    %v1042 = vmax.f32 %v1040, %v1041
    %v1043 = vrot.slane %v1042, 2
    %v1044 = vmax.f32 %v1042, %v1043
    %v1045 = vrot.slane %v1044, 1
    %v1046 = vmax.f32 %v1044, %v1045
    %v1047 = vsub.f32 %v1030, %v1046
    %v1048 = vsub.f32 %v1031, %v1046
    %v1049 = vsub.f32 %v1032, %v1046
    %v1050 = vsub.f32 %v1033, %v1046
    %v1051 = vmul.f32 %v1047, 1.442695
    %v1052 = vpow.pop %v1051
    %v1053 = vmul.f32 %v1048, 1.442695
    %v1054 = vpow.pop %v1053
    %v1055 = vmul.f32 %v1049, 1.442695
    %v1056 = vpow.pop %v1055
    %v1057 = vmul.f32 %v1050, 1.442695
    %v1058 = vpow.pop %v1057
    %v1059 = vmul.f32 %v898, %v1052
    %v1060 = vmul.f32 %v899, %v1054
    %v1061 = vmul.f32 %v900, %v1056
    %v1062 = vmul.f32 %v901, %v1058
    %v1063 = vpack.c.bf16 %v1054, %v1052
    %v1064 = vpack.c.bf16 %v1058, %v1056
    %v1065 = vunpack.c.l.bf16 %v1063
    %v1066 = vunpack.c.h.bf16 %v1063
    %v1067 = vunpack.c.l.bf16 %v1064
    %v1068 = vunpack.c.h.bf16 %v1064
    %v1069 = vsub.f32 %v1052, %v1065
    %v1070 = vsub.f32 %v1054, %v1066
    %v1071 = vsub.f32 %v1056, %v1067
    %v1072 = vsub.f32 %v1058, %v1068
    %v1073 = vpack.c.bf16 %v1070, %v1069
    %v1074 = vpack.c.bf16 %v1072, %v1071
    %v1075 = vpack.c.bf16 %v1060, %v1059
    %v1076 = vpack.c.bf16 %v1062, %v1061
    %v1077 = vunpack.c.l.bf16 %v1075
    %v1078 = vunpack.c.h.bf16 %v1075
    %v1079 = vunpack.c.l.bf16 %v1076
    %v1080 = vunpack.c.h.bf16 %v1076
    %v1081 = vsub.f32 %v1059, %v1077
    %v1082 = vsub.f32 %v1060, %v1078
    %v1083 = vsub.f32 %v1061, %v1079
    %v1084 = vsub.f32 %v1062, %v1080
    %v1085 = vpack.c.bf16 %v1082, %v1081
    %v1086 = vpack.c.bf16 %v1084, %v1083
    %1089 = vrot.lane.b32.xlu0 %v1073, 32
    %v1090 = vpop.permute.xlu0 %1089
    %1091 = vrot.lane.b32.xlu0 %v1074, 32
    %v1092 = vpop.permute.xlu0 %1091
    %1095 = vrot.lane.b32.xlu0 %v1075, 64
    %v1096 = vpop.permute.xlu0 %1095
    %1097 = vrot.lane.b32.xlu0 %v1076, 64
    %v1098 = vpop.permute.xlu0 %1097
    %1101 = vrot.lane.b32.xlu0 %v1085, 96
    %v1102 = vpop.permute.xlu0 %1101
    %1103 = vrot.lane.b32.xlu0 %v1086, 96
    %v1104 = vpop.permute.xlu0 %1103
    %v1107 = vsel %vm156, %v1063, %v1090
    %v1110 = vsel %vm156, %v1064, %v1092
    %v1112 = vsel %vm418, %v1107, %v1096
    %v1114 = vsel %vm418, %v1110, %v1098
    %v1116 = vsel %vm806, %v1112, %v1102
    %v1119 = vsel %vm806, %v1114, %v1104
    %v1123 = vunpack.c.l.b16 %v390
    %v1124 = vunpack.c.l.b16 %v391
    %v1125 = vpack.c.b16 %v1124, %v1123
    %v1127 = vsel %vm156, %v1125, 0
    %1129 = vmatprep.subr.bf16.mxu0 0
    %1130 = vmatpush1.bf16.msra.mxu0 %v1116
    %1131 = vmatprep.subr.bf16.mxu0 0
    %1132 = vmatpush1.bf16.msra.mxu0 %v1119
    %1133 = vmatprep.subr.bf16.mxu0 0
    %1134 = vmatpush1.bf16.msra.mxu0 0
    %1135 = vmatprep.subr.bf16.mxu0 0
    %1136 = vmatpush1.bf16.msra.mxu0 0
    %1137 = vmatprep.subr.bf16.mxu0 0
    %1138 = vmatpush1.bf16.msra.mxu0 0
    %1139 = vmatprep.subr.bf16.mxu0 0
    %1140 = vmatpush1.bf16.msra.mxu0 0
    %1141 = vmatprep.subr.bf16.mxu0 0
    %1142 = vmatpush1.bf16.msra.mxu0 0
    %1143 = vmatprep.subr.bf16.mxu0 0
    %1144 = vmatpush1.bf16.msra.mxu0 0
    %1145 = vmatprep.subr.bf16.mxu0 0
    %1146 = vmatpush1.bf16.msra.mxu0 0
    %1147 = vmatprep.subr.bf16.mxu0 0
    %1148 = vmatpush1.bf16.msra.mxu0 0
    %1149 = vmatprep.subr.bf16.mxu0 0
    %1150 = vmatpush1.bf16.msra.mxu0 0
    %1151 = vmatprep.subr.bf16.mxu0 0
    %1152 = vmatpush1.bf16.msra.mxu0 0
    %1153 = vmatprep.subr.bf16.mxu0 0
    %1154 = vmatpush1.bf16.msra.mxu0 0
    %1155 = vmatprep.subr.bf16.mxu0 0
    %1156 = vmatpush1.bf16.msra.mxu0 0
    %1157 = vmatprep.subr.bf16.mxu0 0
    %1158 = vmatpush1.bf16.msra.mxu0 0
    %1159 = vmatprep.subr.bf16.mxu0 0
    %1160 = vmatpush1.bf16.msra.mxu0 0
    %1161 = vmatprep.mubr.bf16.mxu0 0
    %1162 = vmatmul.mubr.bf16.gmra.mrb[0].mxu0 %v1127
    %v1163 = vpop.f32.mrb[0].mxu0
    %v1164 = vadd.f32 0.0, %v1163
    %v1165 = vpop.f32.mrb[0].mxu0
    %v1166 = vpop.f32.mrb[0].mxu0
    %v1167 = vadd.f32 0.0, %v1166
    %v1168 = vpop.f32.mrb[0].mxu0
    %1169 = vdwg.mxu0
    %1172 = vrot.lane.b32.xlu0 %v1164, 96
    %v1173 = vpop.permute.xlu0 %1172
    %1174 = vrot.lane.b32.xlu0 %v1167, 96
    %v1175 = vpop.permute.xlu0 %1174
    %v1178 = vadd.f32 %v1164, %v1173
    %v1179 = vadd.f32 %v1167, %v1175
    %v1180 = vadd.f32 %v1178, 1e-16
    %v1181 = vadd.f32 %v1179, 1e-16
    %v1182 = vrcp.pop %v1180
    %v1183 = vrcp.pop %v1181
    %v1184 = vmul.f32 %v1180, %v1182
    %v1185 = vmul.f32 %v1181, %v1183
    %v1186 = vsub.f32 2.0, %v1184
    %v1187 = vsub.f32 2.0, %v1185
    %v1188 = vmul.f32 %v1182, %v1186
    %v1189 = vmul.f32 %v1183, %v1187
    %1192 = vrot.lane.b32.xlu0 %v1188, 64
    %v1193 = vpop.permute.xlu0 %1192
    %1194 = vrot.lane.b32.xlu0 %v1189, 64
    %v1195 = vpop.permute.xlu0 %1194
    %v1198 = vmul.f32 %v1178, %v1193
    %v1199 = vmul.f32 %v1179, %v1195
    %1202 = vrot.lane.b32.xlu0 %v1198, 64
    %v1203 = vpop.permute.xlu0 %1202
    %1204 = vrot.lane.b32.xlu0 %v1199, 64
    %v1205 = vpop.permute.xlu0 %1204
    %v1208 = vadd.f32 %v200, %v1203
    %v1209 = vadd.f32 %v201, %v1205
    %v1210 = vld [vmem:[%s394] sm:$0xff]
    %v1211 = vld [vmem:[%s394 + $0x8] sm:$0xff]
    %v1212 = vld [vmem:[%s394 + $0x10] sm:$0xff]
    %v1213 = vld [vmem:[%s394 + $0x18] sm:$0xff]
    %v1214 = vld [vmem:[%s394 + $0x20] sm:$0xff]
    %v1215 = vld [vmem:[%s394 + $0x28] sm:$0xff]
    %v1216 = vld [vmem:[%s394 + $0x30] sm:$0xff]
    %v1217 = vld [vmem:[%s394 + $0x38] sm:$0xff]
    %s1218 = scalar_lea.vmem %s13, 32
    %v1219 = vld [vmem:[%s1218] sm:$0xff]
    %v1220 = vld [vmem:[%s1218 + $0x8] sm:$0xff]
    %v1221 = vld [vmem:[%s1218 + $0x10] sm:$0xff]
    %v1222 = vld [vmem:[%s1218 + $0x18] sm:$0xff]
    %s1223 = scalar_lea.vmem %s14, 1
    %v1224 = vld [vmem:[%s1223] sm:$0x1]
    %v1226 = vlaneseq
    %v1227 = vshrl.u32 %v1226, 7
    %v1228 = vsub.s32 0, %v1227
    %v1229 = vrot.slane %v1224, %v1228
    %v1232 = vsel %vm156, %v1208, 0
    %v1235 = vsel %vm156, %v1209, 0
    %1237 = vmatprep.subr.mxu0 0.0
    %1238 = vmatpush1.msra.mxu0 %v1219
    %1239 = vmatprep.subr.mxu0 0.0
    %1240 = vmatpush1.msra.mxu0 %v1220
    %1241 = vmatprep.subr.mxu0 0.0
    %1242 = vmatpush1.msra.mxu0 %v1221
    %1243 = vmatprep.subr.mxu0 0.0
    %1244 = vmatpush1.msra.mxu0 %v1222
    %1245 = vmatprep.subr.mxu0 0.0
    %1246 = vmatpush1.msra.mxu0 0.0
    %1247 = vmatprep.subr.mxu0 0.0
    %1248 = vmatpush1.msra.mxu0 0.0
    %1249 = vmatprep.subr.mxu0 0.0
    %1250 = vmatpush1.msra.mxu0 0.0
    %1251 = vmatprep.subr.mxu0 0.0
    %1252 = vmatpush1.msra.mxu0 0.0
    %1253 = vmatprep.subr.mxu0 0.0
    %1254 = vmatpush1.msra.mxu0 0.0
    %1255 = vmatprep.subr.mxu0 0.0
    %1256 = vmatpush1.msra.mxu0 0.0
    %1257 = vmatprep.subr.mxu0 0.0
    %1258 = vmatpush1.msra.mxu0 0.0
    %1259 = vmatprep.subr.mxu0 0.0
    %1260 = vmatpush1.msra.mxu0 0.0
    %1261 = vmatprep.subr.mxu0 0.0
    %1262 = vmatpush1.msra.mxu0 0.0
    %1263 = vmatprep.subr.mxu0 0.0
    %1264 = vmatpush1.msra.mxu0 0.0
    %1265 = vmatprep.subr.mxu0 0.0
    %1266 = vmatpush1.msra.mxu0 0.0
    %1267 = vmatprep.subr.mxu0 0.0
    %1268 = vmatpush1.msra.mxu0 0.0
    %1269 = vmatprep.subr.mxu0 0.0
    %1270 = vmatpush1.msra.mxu0 0.0
    %1271 = vmatprep.subr.mxu0 0.0
    %1272 = vmatpush1.msra.mxu0 0.0
    %1273 = vmatprep.subr.mxu0 0.0
    %1274 = vmatpush1.msra.mxu0 0.0
    %1275 = vmatprep.subr.mxu0 0.0
    %1276 = vmatpush1.msra.mxu0 0.0
    %1277 = vmatprep.subr.mxu0 0.0
    %1278 = vmatpush1.msra.mxu0 0.0
    %1279 = vmatprep.subr.mxu0 0.0
    %1280 = vmatpush1.msra.mxu0 0.0
    %1281 = vmatprep.subr.mxu0 0.0
    %1282 = vmatpush1.msra.mxu0 0.0
    %1283 = vmatprep.subr.mxu0 0.0
    %1284 = vmatpush1.msra.mxu0 0.0
    %1285 = vmatprep.subr.mxu0 0.0
    %1286 = vmatpush1.msra.mxu0 0.0
    %1287 = vmatprep.subr.mxu0 0.0
    %1288 = vmatpush1.msra.mxu0 0.0
    %1289 = vmatprep.subr.mxu0 0.0
    %1290 = vmatpush1.msra.mxu0 0.0
    %1291 = vmatprep.subr.mxu0 0.0
    %1292 = vmatpush1.msra.mxu0 0.0
    %1293 = vmatprep.subr.mxu0 0.0
    %1294 = vmatpush1.msra.mxu0 0.0
    %1295 = vmatprep.subr.mxu0 0.0
    %1296 = vmatpush1.msra.mxu0 0.0
    %1297 = vmatprep.subr.mxu0 0.0
    %1298 = vmatpush1.msra.mxu0 0.0
    %1299 = vmatprep.subr.mxu0 0.0
    %1300 = vmatpush1.msra.mxu0 0.0
    %1301 = vmatprep.mubr.f32.mxu0 0.0
    %1302 = vmatmul.mubr.f32.gmra.mrb[0].mxu0 %v1232
    %v1303 = vpop.f32.mrb[0].mxu0
    %v1304 = vadd.f32 %v1229, %v1303
    %v1305 = vpop.f32.mrb[0].mxu0
    %1306 = vmatprep.mubr.f32.mxu0 0.0
    %1307 = vmatmul.mubr.f32.gmra.mrb[0].mxu0 %v1235
    %v1308 = vpop.f32.mrb[0].mxu0
    %v1309 = vadd.f32 %v1229, %v1308
    %v1310 = vpop.f32.mrb[0].mxu0
    %1311 = vdwg.mxu0
    %v1313 = vsel %vm156, %v1304, 0
    %v1316 = vsel %vm156, %v1309, 0
    %1318 = vmatprep.subr.mxu0 0.0
    %1319 = vmatpush1.msra.mxu0 %v1210
    %1320 = vmatprep.subr.mxu0 0.0
    %1321 = vmatpush1.msra.mxu0 %v1211
    %1322 = vmatprep.subr.mxu0 0.0
    %1323 = vmatpush1.msra.mxu0 %v1212
    %1324 = vmatprep.subr.mxu0 0.0
    %1325 = vmatpush1.msra.mxu0 %v1213
    %1326 = vmatprep.subr.mxu0 0.0
    %1327 = vmatpush1.msra.mxu0 0.0
    %1328 = vmatprep.subr.mxu0 0.0
    %1329 = vmatpush1.msra.mxu0 0.0
    %1330 = vmatprep.subr.mxu0 0.0
    %1331 = vmatpush1.msra.mxu0 0.0
    %1332 = vmatprep.subr.mxu0 0.0
    %1333 = vmatpush1.msra.mxu0 0.0
    %1334 = vmatprep.subr.mxu0 0.0
    %1335 = vmatpush1.msra.mxu0 0.0
    %1336 = vmatprep.subr.mxu0 0.0
    %1337 = vmatpush1.msra.mxu0 0.0
    %1338 = vmatprep.subr.mxu0 0.0
    %1339 = vmatpush1.msra.mxu0 0.0
    %1340 = vmatprep.subr.mxu0 0.0
    %1341 = vmatpush1.msra.mxu0 0.0
    %1342 = vmatprep.subr.mxu0 0.0
    %1343 = vmatpush1.msra.mxu0 0.0
    %1344 = vmatprep.subr.mxu0 0.0
    %1345 = vmatpush1.msra.mxu0 0.0
    %1346 = vmatprep.subr.mxu0 0.0
    %1347 = vmatpush1.msra.mxu0 0.0
    %1348 = vmatprep.subr.mxu0 0.0
    %1349 = vmatpush1.msra.mxu0 0.0
    %1350 = vmatprep.subr.mxu0 0.0
    %1351 = vmatpush1.msra.mxu0 0.0
    %1352 = vmatprep.subr.mxu0 0.0
    %1353 = vmatpush1.msra.mxu0 0.0
    %1354 = vmatprep.subr.mxu0 0.0
    %1355 = vmatpush1.msra.mxu0 0.0
    %1356 = vmatprep.subr.mxu0 0.0
    %1357 = vmatpush1.msra.mxu0 0.0
    %1358 = vmatprep.subr.mxu0 0.0
    %1359 = vmatpush1.msra.mxu0 0.0
    %1360 = vmatprep.subr.mxu0 0.0
    %1361 = vmatpush1.msra.mxu0 0.0
    %1362 = vmatprep.subr.mxu0 0.0
    %1363 = vmatpush1.msra.mxu0 0.0
    %1364 = vmatprep.subr.mxu0 0.0
    %1365 = vmatpush1.msra.mxu0 0.0
    %1366 = vmatprep.subr.mxu0 0.0
    %1367 = vmatpush1.msra.mxu0 0.0
    %1368 = vmatprep.subr.mxu0 0.0
    %1369 = vmatpush1.msra.mxu0 0.0
    %1370 = vmatprep.subr.mxu0 0.0
    %1371 = vmatpush1.msra.mxu0 0.0
    %1372 = vmatprep.subr.mxu0 0.0
    %1373 = vmatpush1.msra.mxu0 0.0
    %1374 = vmatprep.subr.mxu0 0.0
    %1375 = vmatpush1.msra.mxu0 0.0
    %1376 = vmatprep.subr.mxu0 0.0
    %1377 = vmatpush1.msra.mxu0 0.0
    %1378 = vmatprep.subr.mxu0 0.0
    %1379 = vmatpush1.msra.mxu0 0.0
    %1380 = vmatprep.subr.mxu0 0.0
    %1381 = vmatpush1.msra.mxu0 0.0
    %1382 = vmatprep.mubr.f32.mxu0 0.0
    %1383 = vmatmul.mubr.f32.gmra.mrb[0].mxu0 %v1313
    %v1384 = vpop.f32.mrb[0].mxu0
    %v1385 = vadd.f32 0.0, %v1384
    %v1386 = vpop.f32.mrb[0].mxu0
    %1387 = vmatprep.mubr.f32.mxu0 0.0
    %1388 = vmatmul.mubr.f32.gmra.mrb[0].mxu0 %v1316
    %v1389 = vpop.f32.mrb[0].mxu0
    %v1390 = vadd.f32 0.0, %v1389
    %v1391 = vpop.f32.mrb[0].mxu0
    %1392 = vdwg.mxu0
    %1393 = vmatprep.subr.mxu0 0.0
    %1394 = vmatpush1.msra.mxu0 %v1214
    %1395 = vmatprep.subr.mxu0 0.0
    %1396 = vmatpush1.msra.mxu0 %v1215
    %1397 = vmatprep.subr.mxu0 0.0
    %1398 = vmatpush1.msra.mxu0 %v1216
    %1399 = vmatprep.subr.mxu0 0.0
    %1400 = vmatpush1.msra.mxu0 %v1217
    %1401 = vmatprep.subr.mxu0 0.0
    %1402 = vmatpush1.msra.mxu0 0.0
    %1403 = vmatprep.subr.mxu0 0.0
    %1404 = vmatpush1.msra.mxu0 0.0
    %1405 = vmatprep.subr.mxu0 0.0
    %1406 = vmatpush1.msra.mxu0 0.0
    %1407 = vmatprep.subr.mxu0 0.0
    %1408 = vmatpush1.msra.mxu0 0.0
    %1409 = vmatprep.subr.mxu0 0.0
    %1410 = vmatpush1.msra.mxu0 0.0
    %1411 = vmatprep.subr.mxu0 0.0
    %1412 = vmatpush1.msra.mxu0 0.0
    %1413 = vmatprep.subr.mxu0 0.0
    %1414 = vmatpush1.msra.mxu0 0.0
    %1415 = vmatprep.subr.mxu0 0.0
    %1416 = vmatpush1.msra.mxu0 0.0
    %1417 = vmatprep.subr.mxu0 0.0
    %1418 = vmatpush1.msra.mxu0 0.0
    %1419 = vmatprep.subr.mxu0 0.0
    %1420 = vmatpush1.msra.mxu0 0.0
    %1421 = vmatprep.subr.mxu0 0.0
    %1422 = vmatpush1.msra.mxu0 0.0
    %1423 = vmatprep.subr.mxu0 0.0
    %1424 = vmatpush1.msra.mxu0 0.0
    %1425 = vmatprep.subr.mxu0 0.0
    %1426 = vmatpush1.msra.mxu0 0.0
    %1427 = vmatprep.subr.mxu0 0.0
    %1428 = vmatpush1.msra.mxu0 0.0
    %1429 = vmatprep.subr.mxu0 0.0
    %1430 = vmatpush1.msra.mxu0 0.0
    %1431 = vmatprep.subr.mxu0 0.0
    %1432 = vmatpush1.msra.mxu0 0.0
    %1433 = vmatprep.subr.mxu0 0.0
    %1434 = vmatpush1.msra.mxu0 0.0
    %1435 = vmatprep.subr.mxu0 0.0
    %1436 = vmatpush1.msra.mxu0 0.0
    %1437 = vmatprep.subr.mxu0 0.0
    %1438 = vmatpush1.msra.mxu0 0.0
    %1439 = vmatprep.subr.mxu0 0.0
    %1440 = vmatpush1.msra.mxu0 0.0
    %1441 = vmatprep.subr.mxu0 0.0
    %1442 = vmatpush1.msra.mxu0 0.0
    %1443 = vmatprep.subr.mxu0 0.0
    %1444 = vmatpush1.msra.mxu0 0.0
    %1445 = vmatprep.subr.mxu0 0.0
    %1446 = vmatpush1.msra.mxu0 0.0
    %1447 = vmatprep.subr.mxu0 0.0
    %1448 = vmatpush1.msra.mxu0 0.0
    %1449 = vmatprep.subr.mxu0 0.0
    %1450 = vmatpush1.msra.mxu0 0.0
    %1451 = vmatprep.subr.mxu0 0.0
    %1452 = vmatpush1.msra.mxu0 0.0
    %1453 = vmatprep.subr.mxu0 0.0
    %1454 = vmatpush1.msra.mxu0 0.0
    %1455 = vmatprep.subr.mxu0 0.0
    %1456 = vmatpush1.msra.mxu0 0.0
    %1457 = vmatprep.mubr.f32.mxu0 0.0
    %1458 = vmatmul.mubr.f32.gmra.mrb[0].mxu0 %v1313
    %v1459 = vpop.f32.mrb[0].mxu0
    %v1460 = vadd.f32 0.0, %v1459
    %v1461 = vpop.f32.mrb[0].mxu0
    %1462 = vmatprep.mubr.f32.mxu0 0.0
    %1463 = vmatmul.mubr.f32.gmra.mrb[0].mxu0 %v1316
    %v1464 = vpop.f32.mrb[0].mxu0
    %v1465 = vadd.f32 0.0, %v1464
    %v1466 = vpop.f32.mrb[0].mxu0
    %1467 = vdwg.mxu0
    %v1468 = vpack.c.bf16 %v1309, %v1304
    %v1469 = vunpack.c.l.bf16 %v1468
    %v1470 = vunpack.c.h.bf16 %v1468
    %v1471 = vsub.f32 %v1304, %v1469
    %v1472 = vsub.f32 %v1309, %v1470
    %v1473 = vpack.c.bf16 %v1472, %v1471
    %v1474 = vpack.c.bf16 %v1465, %v1460
    %v1475 = vunpack.c.l.bf16 %v1474
    %v1476 = vunpack.c.h.bf16 %v1474
    %v1477 = vsub.f32 %v1460, %v1475
    %v1478 = vsub.f32 %v1465, %v1476
    %v1479 = vpack.c.bf16 %v1478, %v1477
    %v1480 = vpack.c.bf16 %v1390, %v1385
    %v1481 = vunpack.c.l.bf16 %v1480
    %v1482 = vunpack.c.h.bf16 %v1480
    %v1483 = vsub.f32 %v1385, %v1481
    %v1484 = vsub.f32 %v1390, %v1482
    %v1485 = vpack.c.bf16 %v1484, %v1483
    %1487 = vrot.lane.b32.xlu0 %v1473, 32
    %v1488 = vpop.permute.xlu0 %1487
    %1490 = vrot.lane.b32.xlu0 %v1474, 64
    %v1491 = vpop.permute.xlu0 %1490
    %1493 = vrot.lane.b32.xlu0 %v1479, 96
    %v1494 = vpop.permute.xlu0 %1493
    %v1497 = vsel %vm156, %v1468, %v1488
    %v1499 = vsel %vm418, %v1497, %v1491
    %v1501 = vsel %vm806, %v1499, %v1494
    %1504 = vrot.lane.b32.xlu0 %v1485, 32
    %v1505 = vpop.permute.xlu0 %1504
    %v1508 = vsel %vm156, %v1480, %v1505
    %1510 = vmatprep.subr.bf16.mxu0 0
    %1511 = vmatpush1.bf16.msra.mxu0 %v1501
    %1512 = vmatprep.subr.bf16.mxu0 0
    %1513 = vmatpush1.bf16.msra.mxu0 0
    %1514 = vmatprep.subr.bf16.mxu0 0
    %1515 = vmatpush1.bf16.msra.mxu0 0
    %1516 = vmatprep.subr.bf16.mxu0 0
    %1517 = vmatpush1.bf16.msra.mxu0 0
    %1518 = vmatprep.subr.bf16.mxu0 0
    %1519 = vmatpush1.bf16.msra.mxu0 0
    %1520 = vmatprep.subr.bf16.mxu0 0
    %1521 = vmatpush1.bf16.msra.mxu0 0
    %1522 = vmatprep.subr.bf16.mxu0 0
    %1523 = vmatpush1.bf16.msra.mxu0 0
    %1524 = vmatprep.subr.bf16.mxu0 0
    %1525 = vmatpush1.bf16.msra.mxu0 0
    %1526 = vmatprep.subr.bf16.mxu0 0
    %1527 = vmatpush1.bf16.msra.mxu0 0
    %1528 = vmatprep.subr.bf16.mxu0 0
    %1529 = vmatpush1.bf16.msra.mxu0 0
    %1530 = vmatprep.subr.bf16.mxu0 0
    %1531 = vmatpush1.bf16.msra.mxu0 0
    %1532 = vmatprep.subr.bf16.mxu0 0
    %1533 = vmatpush1.bf16.msra.mxu0 0
    %1534 = vmatprep.subr.bf16.mxu0 0
    %1535 = vmatpush1.bf16.msra.mxu0 0
    %1536 = vmatprep.subr.bf16.mxu0 0
    %1537 = vmatpush1.bf16.msra.mxu0 0
    %1538 = vmatprep.subr.bf16.mxu0 0
    %1539 = vmatpush1.bf16.msra.mxu0 0
    %1540 = vmatprep.subr.bf16.mxu0 0
    %1541 = vmatpush1.bf16.msra.mxu0 0
    %1542 = vmatprep.mubr.bf16.mxu0 0
    %1543 = vmatmul.mubr.bf16.gmra.mrb[0].mxu0 %v828
    %v1544 = vpop.f32.mrb[0].mxu0
    %v1545 = vadd.f32 0.0, %v1544
    %v1546 = vpop.f32.mrb[0].mxu0
    %v1547 = vpop.f32.mrb[0].mxu0
    %v1548 = vadd.f32 0.0, %v1547
    %v1549 = vpop.f32.mrb[0].mxu0
    %1550 = vmatprep.mubr.bf16.mxu0 0
    %1551 = vmatmul.mubr.bf16.gmra.mrb[0].mxu0 %v831
    %v1552 = vpop.f32.mrb[0].mxu0
    %v1553 = vadd.f32 0.0, %v1552
    %v1554 = vpop.f32.mrb[0].mxu0
    %v1555 = vpop.f32.mrb[0].mxu0
    %v1556 = vadd.f32 0.0, %v1555
    %v1557 = vpop.f32.mrb[0].mxu0
    %1558 = vdwg.mxu0
    %1563 = vrot.lane.b32.xlu0 %v1545, 96
    %v1564 = vpop.permute.xlu0 %1563
    %1565 = vrot.lane.b32.xlu0 %v1548, 96
    %v1566 = vpop.permute.xlu0 %1565
    %1567 = vrot.lane.b32.xlu0 %v1553, 96
    %v1568 = vpop.permute.xlu0 %1567
    %1569 = vrot.lane.b32.xlu0 %v1556, 96
    %v1570 = vpop.permute.xlu0 %1569
    %v1575 = vadd.f32 %v1545, %v1564
    %v1576 = vadd.f32 %v1548, %v1566
    %v1577 = vadd.f32 %v1553, %v1568
    %v1578 = vadd.f32 %v1556, %v1570
    %1579 = vmatprep.subr.bf16.mxu0 0
    %1580 = vmatpush1.bf16.msra.mxu0 %v1508
    %1581 = vmatprep.subr.bf16.mxu0 0
    %1582 = vmatpush1.bf16.msra.mxu0 0
    %1583 = vmatprep.subr.bf16.mxu0 0
    %1584 = vmatpush1.bf16.msra.mxu0 0
    %1585 = vmatprep.subr.bf16.mxu0 0
    %1586 = vmatpush1.bf16.msra.mxu0 0
    %1587 = vmatprep.subr.bf16.mxu0 0
    %1588 = vmatpush1.bf16.msra.mxu0 0
    %1589 = vmatprep.subr.bf16.mxu0 0
    %1590 = vmatpush1.bf16.msra.mxu0 0
    %1591 = vmatprep.subr.bf16.mxu0 0
    %1592 = vmatpush1.bf16.msra.mxu0 0
    %1593 = vmatprep.subr.bf16.mxu0 0
    %1594 = vmatpush1.bf16.msra.mxu0 0
    %1595 = vmatprep.subr.bf16.mxu0 0
    %1596 = vmatpush1.bf16.msra.mxu0 0
    %1597 = vmatprep.subr.bf16.mxu0 0
    %1598 = vmatpush1.bf16.msra.mxu0 0
    %1599 = vmatprep.subr.bf16.mxu0 0
    %1600 = vmatpush1.bf16.msra.mxu0 0
    %1601 = vmatprep.subr.bf16.mxu0 0
    %1602 = vmatpush1.bf16.msra.mxu0 0
    %1603 = vmatprep.subr.bf16.mxu0 0
    %1604 = vmatpush1.bf16.msra.mxu0 0
    %1605 = vmatprep.subr.bf16.mxu0 0
    %1606 = vmatpush1.bf16.msra.mxu0 0
    %1607 = vmatprep.subr.bf16.mxu0 0
    %1608 = vmatpush1.bf16.msra.mxu0 0
    %1609 = vmatprep.subr.bf16.mxu0 0
    %1610 = vmatpush1.bf16.msra.mxu0 0
    %1611 = vmatprep.mubr.bf16.mxu0 0
    %1612 = vmatmul.mubr.bf16.gmra.mrb[0].mxu0 %v913
    %v1613 = vpop.f32.mrb[0].mxu0
    %v1614 = vadd.f32 0.0, %v1613
    %v1615 = vpop.f32.mrb[0].mxu0
    %v1616 = vpop.f32.mrb[0].mxu0
    %v1617 = vadd.f32 0.0, %v1616
    %v1618 = vpop.f32.mrb[0].mxu0
    %1619 = vmatprep.mubr.bf16.mxu0 0
    %1620 = vmatmul.mubr.bf16.gmra.mrb[0].mxu0 %v916
    %v1621 = vpop.f32.mrb[0].mxu0
    %v1622 = vadd.f32 0.0, %v1621
    %v1623 = vpop.f32.mrb[0].mxu0
    %v1624 = vpop.f32.mrb[0].mxu0
    %v1625 = vadd.f32 0.0, %v1624
    %v1626 = vpop.f32.mrb[0].mxu0
    %1627 = vdwg.mxu0
    %1632 = vrot.lane.b32.xlu0 %v1614, 96
    %v1633 = vpop.permute.xlu0 %1632
    %1634 = vrot.lane.b32.xlu0 %v1617, 96
    %v1635 = vpop.permute.xlu0 %1634
    %1636 = vrot.lane.b32.xlu0 %v1622, 96
    %v1637 = vpop.permute.xlu0 %1636
    %1638 = vrot.lane.b32.xlu0 %v1625, 96
    %v1639 = vpop.permute.xlu0 %1638
    %v1644 = vadd.f32 %v1614, %v1633
    %v1645 = vadd.f32 %v1617, %v1635
    %v1646 = vadd.f32 %v1622, %v1637
    %v1647 = vadd.f32 %v1625, %v1639
    %1652 = vrot.lane.b32.xlu0 %v1575, 64
    %v1653 = vpop.permute.xlu0 %1652
    %1654 = vrot.lane.b32.xlu0 %v1576, 64
    %v1655 = vpop.permute.xlu0 %1654
    %1656 = vrot.lane.b32.xlu0 %v1577, 64
    %v1657 = vpop.permute.xlu0 %1656
    %1658 = vrot.lane.b32.xlu0 %v1578, 64
    %v1659 = vpop.permute.xlu0 %1658
    %v1664 = vadd.f32 %v1644, %v1653
    %v1665 = vadd.f32 %v1645, %v1655
    %v1666 = vadd.f32 %v1646, %v1657
    %v1667 = vadd.f32 %v1647, %v1659
    %1672 = vrot.lane.b32.xlu0 %v500, 96
    %v1673 = vpop.permute.xlu0 %1672
    %1674 = vrot.lane.b32.xlu0 %v505, 96
    %v1675 = vpop.permute.xlu0 %1674
    %1676 = vrot.lane.b32.xlu0 %v510, 96
    %v1677 = vpop.permute.xlu0 %1676
    %1678 = vrot.lane.b32.xlu0 %v515, 96
    %v1679 = vpop.permute.xlu0 %1678
    %v1684 = vadd.f32 %v1664, %v1673
    %v1685 = vadd.f32 %v1665, %v1675
    %v1686 = vadd.f32 %v1666, %v1677
    %v1687 = vadd.f32 %v1667, %v1679
    %s1688 = scalar_lea.vmem %s16, 1
    %v1689 = vld [vmem:[%s1688] sm:$0x1]
    %v1691 = vlaneseq
    %v1692 = vshrl.u32 %v1691, 7
    %v1693 = vsub.s32 0, %v1692
    %v1694 = vrot.slane %v1689, %v1693
    %v1696 = vadd.f32 %v1684, %v1694
    %v1697 = vadd.f32 %v1685, %v1694
    %v1698 = vadd.f32 %v1686, %v1694
    %v1699 = vadd.f32 %v1687, %v1694
    %vm1700 = vcmp.gt.f32.partialorder %v1696, 0.0
    %vm1701 = vcmp.gt.f32.partialorder %v1697, 0.0
    %vm1702 = vcmp.gt.f32.partialorder %v1698, 0.0
    %vm1703 = vcmp.gt.f32.partialorder %v1699, 0.0
    %v1704 = vmul.f32 %v1696, 0.2
    %v1705 = vmul.f32 %v1697, 0.2
    %v1706 = vmul.f32 %v1698, 0.2
    %v1707 = vmul.f32 %v1699, 0.2
    %v1708 = vsel %vm1700, %v1696, %v1704
    %v1709 = vsel %vm1701, %v1697, %v1705
    %v1710 = vsel %vm1702, %v1698, %v1706
    %v1711 = vsel %vm1703, %v1699, %v1707
    %v1712 = vsel %vm156, %v1708, -inf
    %v1713 = vsel %vm156, %v1709, -inf
    %v1714 = vsel %vm156, %v1710, -inf
    %v1715 = vsel %vm156, %v1711, -inf
    %v1716 = vmax.f32 %v1712, %v1713
    %v1717 = vmax.f32 %v1714, %v1715
    %v1718 = vmax.f32 %v1716, %v1717
    %v1719 = vrot.slane %v1718, 4
    %v1720 = vmax.f32 %v1718, %v1719
    %v1721 = vrot.slane %v1720, 2
    %v1722 = vmax.f32 %v1720, %v1721
    %v1723 = vrot.slane %v1722, 1
    %v1724 = vmax.f32 %v1722, %v1723
    %v1725 = vsub.f32 %v1708, %v1724
    %v1726 = vsub.f32 %v1709, %v1724
    %v1727 = vsub.f32 %v1710, %v1724
    %v1728 = vsub.f32 %v1711, %v1724
    %v1729 = vmul.f32 %v1725, 1.442695
    %v1730 = vpow.pop %v1729
    %v1731 = vmul.f32 %v1726, 1.442695
    %v1732 = vpow.pop %v1731
    %v1733 = vmul.f32 %v1727, 1.442695
    %v1734 = vpow.pop %v1733
    %v1735 = vmul.f32 %v1728, 1.442695
    %v1736 = vpow.pop %v1735
    %v1737 = vmul.f32 %v1575, %v1730
    %v1738 = vmul.f32 %v1576, %v1732
    %v1739 = vmul.f32 %v1577, %v1734
    %v1740 = vmul.f32 %v1578, %v1736
    %v1741 = vpack.c.bf16 %v1732, %v1730
    %v1742 = vpack.c.bf16 %v1736, %v1734
    %v1743 = vunpack.c.l.bf16 %v1741
    %v1744 = vunpack.c.h.bf16 %v1741
    %v1745 = vunpack.c.l.bf16 %v1742
    %v1746 = vunpack.c.h.bf16 %v1742
    %v1747 = vsub.f32 %v1730, %v1743
    %v1748 = vsub.f32 %v1732, %v1744
    %v1749 = vsub.f32 %v1734, %v1745
    %v1750 = vsub.f32 %v1736, %v1746
    %v1751 = vpack.c.bf16 %v1748, %v1747
    %v1752 = vpack.c.bf16 %v1750, %v1749
    %v1753 = vpack.c.bf16 %v1738, %v1737
    %v1754 = vpack.c.bf16 %v1740, %v1739
    %v1755 = vunpack.c.l.bf16 %v1753
    %v1756 = vunpack.c.h.bf16 %v1753
    %v1757 = vunpack.c.l.bf16 %v1754
    %v1758 = vunpack.c.h.bf16 %v1754
    %v1759 = vsub.f32 %v1737, %v1755
    %v1760 = vsub.f32 %v1738, %v1756
    %v1761 = vsub.f32 %v1739, %v1757
    %v1762 = vsub.f32 %v1740, %v1758
    %v1763 = vpack.c.bf16 %v1760, %v1759
    %v1764 = vpack.c.bf16 %v1762, %v1761
    %1767 = vrot.lane.b32.xlu0 %v1751, 32
    %v1768 = vpop.permute.xlu0 %1767
    %1769 = vrot.lane.b32.xlu0 %v1752, 32
    %v1770 = vpop.permute.xlu0 %1769
    %1773 = vrot.lane.b32.xlu0 %v1753, 64
    %v1774 = vpop.permute.xlu0 %1773
    %1775 = vrot.lane.b32.xlu0 %v1754, 64
    %v1776 = vpop.permute.xlu0 %1775
    %1779 = vrot.lane.b32.xlu0 %v1763, 96
    %v1780 = vpop.permute.xlu0 %1779
    %1781 = vrot.lane.b32.xlu0 %v1764, 96
    %v1782 = vpop.permute.xlu0 %1781
    %v1785 = vsel %vm156, %v1741, %v1768
    %v1788 = vsel %vm156, %v1742, %v1770
    %v1790 = vsel %vm418, %v1785, %v1774
    %v1792 = vsel %vm418, %v1788, %v1776
    %v1794 = vsel %vm806, %v1790, %v1780
    %v1797 = vsel %vm806, %v1792, %v1782
    %1799 = vmatprep.subr.bf16.mxu0 0
    %1800 = vmatpush1.bf16.msra.mxu0 %v1794
    %1801 = vmatprep.subr.bf16.mxu0 0
    %1802 = vmatpush1.bf16.msra.mxu0 %v1797
    %1803 = vmatprep.subr.bf16.mxu0 0
    %1804 = vmatpush1.bf16.msra.mxu0 0
    %1805 = vmatprep.subr.bf16.mxu0 0
    %1806 = vmatpush1.bf16.msra.mxu0 0
    %1807 = vmatprep.subr.bf16.mxu0 0
    %1808 = vmatpush1.bf16.msra.mxu0 0
    %1809 = vmatprep.subr.bf16.mxu0 0
    %1810 = vmatpush1.bf16.msra.mxu0 0
    %1811 = vmatprep.subr.bf16.mxu0 0
    %1812 = vmatpush1.bf16.msra.mxu0 0
    %1813 = vmatprep.subr.bf16.mxu0 0
    %1814 = vmatpush1.bf16.msra.mxu0 0
    %1815 = vmatprep.subr.bf16.mxu0 0
    %1816 = vmatpush1.bf16.msra.mxu0 0
    %1817 = vmatprep.subr.bf16.mxu0 0
    %1818 = vmatpush1.bf16.msra.mxu0 0
    %1819 = vmatprep.subr.bf16.mxu0 0
    %1820 = vmatpush1.bf16.msra.mxu0 0
    %1821 = vmatprep.subr.bf16.mxu0 0
    %1822 = vmatpush1.bf16.msra.mxu0 0
    %1823 = vmatprep.subr.bf16.mxu0 0
    %1824 = vmatpush1.bf16.msra.mxu0 0
    %1825 = vmatprep.subr.bf16.mxu0 0
    %1826 = vmatpush1.bf16.msra.mxu0 0
    %1827 = vmatprep.subr.bf16.mxu0 0
    %1828 = vmatpush1.bf16.msra.mxu0 0
    %1829 = vmatprep.subr.bf16.mxu0 0
    %1830 = vmatpush1.bf16.msra.mxu0 0
    %1831 = vmatprep.mubr.bf16.mxu0 0
    %1832 = vmatmul.mubr.bf16.gmra.mrb[0].mxu0 %v1127
    %v1833 = vpop.f32.mrb[0].mxu0
    %v1834 = vadd.f32 0.0, %v1833
    %v1835 = vpop.f32.mrb[0].mxu0
    %v1836 = vpop.f32.mrb[0].mxu0
    %v1837 = vadd.f32 0.0, %v1836
    %v1838 = vpop.f32.mrb[0].mxu0
    %1839 = vdwg.mxu0
    %1842 = vrot.lane.b32.xlu0 %v1834, 96
    %v1843 = vpop.permute.xlu0 %1842
    %1844 = vrot.lane.b32.xlu0 %v1837, 96
    %v1845 = vpop.permute.xlu0 %1844
    %v1848 = vadd.f32 %v1834, %v1843
    %v1849 = vadd.f32 %v1837, %v1845
    %v1850 = vadd.f32 %v1848, 1e-16
    %v1851 = vadd.f32 %v1849, 1e-16
    %v1852 = vrcp.pop %v1850
    %v1853 = vrcp.pop %v1851
    %v1854 = vmul.f32 %v1850, %v1852
    %v1855 = vmul.f32 %v1851, %v1853
    %v1856 = vsub.f32 2.0, %v1854
    %v1857 = vsub.f32 2.0, %v1855
    %v1858 = vmul.f32 %v1852, %v1856
    %v1859 = vmul.f32 %v1853, %v1857
    %1862 = vrot.lane.b32.xlu0 %v1858, 64
    %v1863 = vpop.permute.xlu0 %1862
    %1864 = vrot.lane.b32.xlu0 %v1859, 64
    %v1865 = vpop.permute.xlu0 %1864
    %v1868 = vmul.f32 %v1848, %v1863
    %v1869 = vmul.f32 %v1849, %v1865
    %1872 = vrot.lane.b32.xlu0 %v1868, 64
    %v1873 = vpop.permute.xlu0 %1872
    %1874 = vrot.lane.b32.xlu0 %v1869, 64
    %v1875 = vpop.permute.xlu0 %1874
    %v1878 = vadd.f32 %v1208, %v1873
    %v1879 = vadd.f32 %v1209, %v1875
    %v1880 = vld [vmem:[%s397] sm:$0xff]
    %v1881 = vld [vmem:[%s397 + $0x8] sm:$0xff]
    %v1882 = vld [vmem:[%s397 + $0x10] sm:$0xff]
    %v1883 = vld [vmem:[%s397 + $0x18] sm:$0xff]
    %v1884 = vld [vmem:[%s397 + $0x20] sm:$0xff]
    %v1885 = vld [vmem:[%s397 + $0x28] sm:$0xff]
    %v1886 = vld [vmem:[%s397 + $0x30] sm:$0xff]
    %v1887 = vld [vmem:[%s397 + $0x38] sm:$0xff]
    %s1888 = scalar_lea.vmem %s13, 64
    %v1889 = vld [vmem:[%s1888] sm:$0xff]
    %v1890 = vld [vmem:[%s1888 + $0x8] sm:$0xff]
    %v1891 = vld [vmem:[%s1888 + $0x10] sm:$0xff]
    %v1892 = vld [vmem:[%s1888 + $0x18] sm:$0xff]
    %s1893 = scalar_lea.vmem %s14, 2
    %v1894 = vld [vmem:[%s1893] sm:$0x1]
    %v1896 = vlaneseq
    %v1897 = vshrl.u32 %v1896, 7
    %v1898 = vsub.s32 0, %v1897
    %v1899 = vrot.slane %v1894, %v1898
    %v1902 = vsel %vm156, %v1878, 0
    %v1905 = vsel %vm156, %v1879, 0
    %1907 = vmatprep.subr.mxu0 0.0
    %1908 = vmatpush1.msra.mxu0 %v1889
    %1909 = vmatprep.subr.mxu0 0.0
    %1910 = vmatpush1.msra.mxu0 %v1890
    %1911 = vmatprep.subr.mxu0 0.0
    %1912 = vmatpush1.msra.mxu0 %v1891
    %1913 = vmatprep.subr.mxu0 0.0
    %1914 = vmatpush1.msra.mxu0 %v1892
    %1915 = vmatprep.subr.mxu0 0.0
    %1916 = vmatpush1.msra.mxu0 0.0
    %1917 = vmatprep.subr.mxu0 0.0
    %1918 = vmatpush1.msra.mxu0 0.0
    %1919 = vmatprep.subr.mxu0 0.0
    %1920 = vmatpush1.msra.mxu0 0.0
    %1921 = vmatprep.subr.mxu0 0.0
    %1922 = vmatpush1.msra.mxu0 0.0
    %1923 = vmatprep.subr.mxu0 0.0
    %1924 = vmatpush1.msra.mxu0 0.0
    %1925 = vmatprep.subr.mxu0 0.0
    %1926 = vmatpush1.msra.mxu0 0.0
    %1927 = vmatprep.subr.mxu0 0.0
    %1928 = vmatpush1.msra.mxu0 0.0
    %1929 = vmatprep.subr.mxu0 0.0
    %1930 = vmatpush1.msra.mxu0 0.0
    %1931 = vmatprep.subr.mxu0 0.0
    %1932 = vmatpush1.msra.mxu0 0.0
    %1933 = vmatprep.subr.mxu0 0.0
    %1934 = vmatpush1.msra.mxu0 0.0
    %1935 = vmatprep.subr.mxu0 0.0
    %1936 = vmatpush1.msra.mxu0 0.0
    %1937 = vmatprep.subr.mxu0 0.0
    %1938 = vmatpush1.msra.mxu0 0.0
    %1939 = vmatprep.subr.mxu0 0.0
    %1940 = vmatpush1.msra.mxu0 0.0
    %1941 = vmatprep.subr.mxu0 0.0
    %1942 = vmatpush1.msra.mxu0 0.0
    %1943 = vmatprep.subr.mxu0 0.0
    %1944 = vmatpush1.msra.mxu0 0.0
    %1945 = vmatprep.subr.mxu0 0.0
    %1946 = vmatpush1.msra.mxu0 0.0
    %1947 = vmatprep.subr.mxu0 0.0
    %1948 = vmatpush1.msra.mxu0 0.0
    %1949 = vmatprep.subr.mxu0 0.0
    %1950 = vmatpush1.msra.mxu0 0.0
    %1951 = vmatprep.subr.mxu0 0.0
    %1952 = vmatpush1.msra.mxu0 0.0
    %1953 = vmatprep.subr.mxu0 0.0
    %1954 = vmatpush1.msra.mxu0 0.0
    %1955 = vmatprep.subr.mxu0 0.0
    %1956 = vmatpush1.msra.mxu0 0.0
    %1957 = vmatprep.subr.mxu0 0.0
    %1958 = vmatpush1.msra.mxu0 0.0
    %1959 = vmatprep.subr.mxu0 0.0
    %1960 = vmatpush1.msra.mxu0 0.0
    %1961 = vmatprep.subr.mxu0 0.0
    %1962 = vmatpush1.msra.mxu0 0.0
    %1963 = vmatprep.subr.mxu0 0.0
    %1964 = vmatpush1.msra.mxu0 0.0
    %1965 = vmatprep.subr.mxu0 0.0
    %1966 = vmatpush1.msra.mxu0 0.0
    %1967 = vmatprep.subr.mxu0 0.0
    %1968 = vmatpush1.msra.mxu0 0.0
    %1969 = vmatprep.subr.mxu0 0.0
    %1970 = vmatpush1.msra.mxu0 0.0
    %1971 = vmatprep.mubr.f32.mxu0 0.0
    %1972 = vmatmul.mubr.f32.gmra.mrb[0].mxu0 %v1902
    %v1973 = vpop.f32.mrb[0].mxu0
    %v1974 = vadd.f32 %v1899, %v1973
    %v1975 = vpop.f32.mrb[0].mxu0
    %1976 = vmatprep.mubr.f32.mxu0 0.0
    %1977 = vmatmul.mubr.f32.gmra.mrb[0].mxu0 %v1905
    %v1978 = vpop.f32.mrb[0].mxu0
    %v1979 = vadd.f32 %v1899, %v1978
    %v1980 = vpop.f32.mrb[0].mxu0
    %1981 = vdwg.mxu0
    %v1983 = vsel %vm156, %v1974, 0
    %v1986 = vsel %vm156, %v1979, 0
    %1988 = vmatprep.subr.mxu0 0.0
    %1989 = vmatpush1.msra.mxu0 %v1880
    %1990 = vmatprep.subr.mxu0 0.0
    %1991 = vmatpush1.msra.mxu0 %v1881
    %1992 = vmatprep.subr.mxu0 0.0
    %1993 = vmatpush1.msra.mxu0 %v1882
    %1994 = vmatprep.subr.mxu0 0.0
    %1995 = vmatpush1.msra.mxu0 %v1883
    %1996 = vmatprep.subr.mxu0 0.0
    %1997 = vmatpush1.msra.mxu0 0.0
    %1998 = vmatprep.subr.mxu0 0.0
    %1999 = vmatpush1.msra.mxu0 0.0
    %2000 = vmatprep.subr.mxu0 0.0
    %2001 = vmatpush1.msra.mxu0 0.0
    %2002 = vmatprep.subr.mxu0 0.0
    %2003 = vmatpush1.msra.mxu0 0.0
    %2004 = vmatprep.subr.mxu0 0.0
    %2005 = vmatpush1.msra.mxu0 0.0
    %2006 = vmatprep.subr.mxu0 0.0
    %2007 = vmatpush1.msra.mxu0 0.0
    %2008 = vmatprep.subr.mxu0 0.0
    %2009 = vmatpush1.msra.mxu0 0.0
    %2010 = vmatprep.subr.mxu0 0.0
    %2011 = vmatpush1.msra.mxu0 0.0
    %2012 = vmatprep.subr.mxu0 0.0
    %2013 = vmatpush1.msra.mxu0 0.0
    %2014 = vmatprep.subr.mxu0 0.0
    %2015 = vmatpush1.msra.mxu0 0.0
    %2016 = vmatprep.subr.mxu0 0.0
    %2017 = vmatpush1.msra.mxu0 0.0
    %2018 = vmatprep.subr.mxu0 0.0
    %2019 = vmatpush1.msra.mxu0 0.0
    %2020 = vmatprep.subr.mxu0 0.0
    %2021 = vmatpush1.msra.mxu0 0.0
    %2022 = vmatprep.subr.mxu0 0.0
    %2023 = vmatpush1.msra.mxu0 0.0
    %2024 = vmatprep.subr.mxu0 0.0
    %2025 = vmatpush1.msra.mxu0 0.0
    %2026 = vmatprep.subr.mxu0 0.0
    %2027 = vmatpush1.msra.mxu0 0.0
    %2028 = vmatprep.subr.mxu0 0.0
    %2029 = vmatpush1.msra.mxu0 0.0
    %2030 = vmatprep.subr.mxu0 0.0
    %2031 = vmatpush1.msra.mxu0 0.0
    %2032 = vmatprep.subr.mxu0 0.0
    %2033 = vmatpush1.msra.mxu0 0.0
    %2034 = vmatprep.subr.mxu0 0.0
    %2035 = vmatpush1.msra.mxu0 0.0
    %2036 = vmatprep.subr.mxu0 0.0
    %2037 = vmatpush1.msra.mxu0 0.0
    %2038 = vmatprep.subr.mxu0 0.0
    %2039 = vmatpush1.msra.mxu0 0.0
    %2040 = vmatprep.subr.mxu0 0.0
    %2041 = vmatpush1.msra.mxu0 0.0
    %2042 = vmatprep.subr.mxu0 0.0
    %2043 = vmatpush1.msra.mxu0 0.0
    %2044 = vmatprep.subr.mxu0 0.0
    %2045 = vmatpush1.msra.mxu0 0.0
    %2046 = vmatprep.subr.mxu0 0.0
    %2047 = vmatpush1.msra.mxu0 0.0
    %2048 = vmatprep.subr.mxu0 0.0
    %2049 = vmatpush1.msra.mxu0 0.0
    %2050 = vmatprep.subr.mxu0 0.0
    %2051 = vmatpush1.msra.mxu0 0.0
    %2052 = vmatprep.mubr.f32.mxu0 0.0
    %2053 = vmatmul.mubr.f32.gmra.mrb[0].mxu0 %v1983
    %v2054 = vpop.f32.mrb[0].mxu0
    %v2055 = vadd.f32 0.0, %v2054
    %v2056 = vpop.f32.mrb[0].mxu0
    %2057 = vmatprep.mubr.f32.mxu0 0.0
    %2058 = vmatmul.mubr.f32.gmra.mrb[0].mxu0 %v1986
    %v2059 = vpop.f32.mrb[0].mxu0
    %v2060 = vadd.f32 0.0, %v2059
    %v2061 = vpop.f32.mrb[0].mxu0
    %2062 = vdwg.mxu0
    %2063 = vmatprep.subr.mxu0 0.0
    %2064 = vmatpush1.msra.mxu0 %v1884
    %2065 = vmatprep.subr.mxu0 0.0
    %2066 = vmatpush1.msra.mxu0 %v1885
    %2067 = vmatprep.subr.mxu0 0.0
    %2068 = vmatpush1.msra.mxu0 %v1886
    %2069 = vmatprep.subr.mxu0 0.0
    %2070 = vmatpush1.msra.mxu0 %v1887
    %2071 = vmatprep.subr.mxu0 0.0
    %2072 = vmatpush1.msra.mxu0 0.0
    %2073 = vmatprep.subr.mxu0 0.0
    %2074 = vmatpush1.msra.mxu0 0.0
    %2075 = vmatprep.subr.mxu0 0.0
    %2076 = vmatpush1.msra.mxu0 0.0
    %2077 = vmatprep.subr.mxu0 0.0
    %2078 = vmatpush1.msra.mxu0 0.0
    %2079 = vmatprep.subr.mxu0 0.0
    %2080 = vmatpush1.msra.mxu0 0.0
    %2081 = vmatprep.subr.mxu0 0.0
    %2082 = vmatpush1.msra.mxu0 0.0
    %2083 = vmatprep.subr.mxu0 0.0
    %2084 = vmatpush1.msra.mxu0 0.0
    %2085 = vmatprep.subr.mxu0 0.0
    %2086 = vmatpush1.msra.mxu0 0.0
    %2087 = vmatprep.subr.mxu0 0.0
    %2088 = vmatpush1.msra.mxu0 0.0
    %2089 = vmatprep.subr.mxu0 0.0
    %2090 = vmatpush1.msra.mxu0 0.0
    %2091 = vmatprep.subr.mxu0 0.0
    %2092 = vmatpush1.msra.mxu0 0.0
    %2093 = vmatprep.subr.mxu0 0.0
    %2094 = vmatpush1.msra.mxu0 0.0
    %2095 = vmatprep.subr.mxu0 0.0
    %2096 = vmatpush1.msra.mxu0 0.0
    %2097 = vmatprep.subr.mxu0 0.0
    %2098 = vmatpush1.msra.mxu0 0.0
    %2099 = vmatprep.subr.mxu0 0.0
    %2100 = vmatpush1.msra.mxu0 0.0
    %2101 = vmatprep.subr.mxu0 0.0
    %2102 = vmatpush1.msra.mxu0 0.0
    %2103 = vmatprep.subr.mxu0 0.0
    %2104 = vmatpush1.msra.mxu0 0.0
    %2105 = vmatprep.subr.mxu0 0.0
    %2106 = vmatpush1.msra.mxu0 0.0
    %2107 = vmatprep.subr.mxu0 0.0
    %2108 = vmatpush1.msra.mxu0 0.0
    %2109 = vmatprep.subr.mxu0 0.0
    %2110 = vmatpush1.msra.mxu0 0.0
    %2111 = vmatprep.subr.mxu0 0.0
    %2112 = vmatpush1.msra.mxu0 0.0
    %2113 = vmatprep.subr.mxu0 0.0
    %2114 = vmatpush1.msra.mxu0 0.0
    %2115 = vmatprep.subr.mxu0 0.0
    %2116 = vmatpush1.msra.mxu0 0.0
    %2117 = vmatprep.subr.mxu0 0.0
    %2118 = vmatpush1.msra.mxu0 0.0
    %2119 = vmatprep.subr.mxu0 0.0
    %2120 = vmatpush1.msra.mxu0 0.0
    %2121 = vmatprep.subr.mxu0 0.0
    %2122 = vmatpush1.msra.mxu0 0.0
    %2123 = vmatprep.subr.mxu0 0.0
    %2124 = vmatpush1.msra.mxu0 0.0
    %2125 = vmatprep.subr.mxu0 0.0
    %2126 = vmatpush1.msra.mxu0 0.0
    %2127 = vmatprep.mubr.f32.mxu0 0.0
    %2128 = vmatmul.mubr.f32.gmra.mrb[0].mxu0 %v1983
    %v2129 = vpop.f32.mrb[0].mxu0
    %v2130 = vadd.f32 0.0, %v2129
    %v2131 = vpop.f32.mrb[0].mxu0
    %2132 = vmatprep.mubr.f32.mxu0 0.0
    %2133 = vmatmul.mubr.f32.gmra.mrb[0].mxu0 %v1986
    %v2134 = vpop.f32.mrb[0].mxu0
    %v2135 = vadd.f32 0.0, %v2134
    %v2136 = vpop.f32.mrb[0].mxu0
    %2137 = vdwg.mxu0
    %v2138 = vpack.c.bf16 %v1979, %v1974
    %v2139 = vunpack.c.l.bf16 %v2138
    %v2140 = vunpack.c.h.bf16 %v2138
    %v2141 = vsub.f32 %v1974, %v2139
    %v2142 = vsub.f32 %v1979, %v2140
    %v2143 = vpack.c.bf16 %v2142, %v2141
    %v2144 = vpack.c.bf16 %v2135, %v2130
    %v2145 = vunpack.c.l.bf16 %v2144
    %v2146 = vunpack.c.h.bf16 %v2144
    %v2147 = vsub.f32 %v2130, %v2145
    %v2148 = vsub.f32 %v2135, %v2146
    %v2149 = vpack.c.bf16 %v2148, %v2147
    %v2150 = vpack.c.bf16 %v2060, %v2055
    %v2151 = vunpack.c.l.bf16 %v2150
    %v2152 = vunpack.c.h.bf16 %v2150
    %v2153 = vsub.f32 %v2055, %v2151
    %v2154 = vsub.f32 %v2060, %v2152
    %v2155 = vpack.c.bf16 %v2154, %v2153
    %2157 = vrot.lane.b32.xlu0 %v2143, 32
    %v2158 = vpop.permute.xlu0 %2157
    %2160 = vrot.lane.b32.xlu0 %v2144, 64
    %v2161 = vpop.permute.xlu0 %2160
    %2163 = vrot.lane.b32.xlu0 %v2149, 96
    %v2164 = vpop.permute.xlu0 %2163
    %v2167 = vsel %vm156, %v2138, %v2158
    %v2169 = vsel %vm418, %v2167, %v2161
    %v2171 = vsel %vm806, %v2169, %v2164
    %2174 = vrot.lane.b32.xlu0 %v2155, 32
    %v2175 = vpop.permute.xlu0 %2174
    %v2178 = vsel %vm156, %v2150, %v2175
    %2180 = vmatprep.subr.bf16.mxu0 0
    %2181 = vmatpush1.bf16.msra.mxu0 %v2171
    %2182 = vmatprep.subr.bf16.mxu0 0
    %2183 = vmatpush1.bf16.msra.mxu0 0
    %2184 = vmatprep.subr.bf16.mxu0 0
    %2185 = vmatpush1.bf16.msra.mxu0 0
    %2186 = vmatprep.subr.bf16.mxu0 0
    %2187 = vmatpush1.bf16.msra.mxu0 0
    %2188 = vmatprep.subr.bf16.mxu0 0
    %2189 = vmatpush1.bf16.msra.mxu0 0
    %2190 = vmatprep.subr.bf16.mxu0 0
    %2191 = vmatpush1.bf16.msra.mxu0 0
    %2192 = vmatprep.subr.bf16.mxu0 0
    %2193 = vmatpush1.bf16.msra.mxu0 0
    %2194 = vmatprep.subr.bf16.mxu0 0
    %2195 = vmatpush1.bf16.msra.mxu0 0
    %2196 = vmatprep.subr.bf16.mxu0 0
    %2197 = vmatpush1.bf16.msra.mxu0 0
    %2198 = vmatprep.subr.bf16.mxu0 0
    %2199 = vmatpush1.bf16.msra.mxu0 0
    %2200 = vmatprep.subr.bf16.mxu0 0
    %2201 = vmatpush1.bf16.msra.mxu0 0
    %2202 = vmatprep.subr.bf16.mxu0 0
    %2203 = vmatpush1.bf16.msra.mxu0 0
    %2204 = vmatprep.subr.bf16.mxu0 0
    %2205 = vmatpush1.bf16.msra.mxu0 0
    %2206 = vmatprep.subr.bf16.mxu0 0
    %2207 = vmatpush1.bf16.msra.mxu0 0
    %2208 = vmatprep.subr.bf16.mxu0 0
    %2209 = vmatpush1.bf16.msra.mxu0 0
    %2210 = vmatprep.subr.bf16.mxu0 0
    %2211 = vmatpush1.bf16.msra.mxu0 0
    %2212 = vmatprep.mubr.bf16.mxu0 0
    %2213 = vmatmul.mubr.bf16.gmra.mrb[0].mxu0 %v828
    %v2214 = vpop.f32.mrb[0].mxu0
    %v2215 = vadd.f32 0.0, %v2214
    %v2216 = vpop.f32.mrb[0].mxu0
    %v2217 = vpop.f32.mrb[0].mxu0
    %v2218 = vadd.f32 0.0, %v2217
    %v2219 = vpop.f32.mrb[0].mxu0
    %2220 = vmatprep.mubr.bf16.mxu0 0
    %2221 = vmatmul.mubr.bf16.gmra.mrb[0].mxu0 %v831
    %v2222 = vpop.f32.mrb[0].mxu0
    %v2223 = vadd.f32 0.0, %v2222
    %v2224 = vpop.f32.mrb[0].mxu0
    %v2225 = vpop.f32.mrb[0].mxu0
    %v2226 = vadd.f32 0.0, %v2225
    %v2227 = vpop.f32.mrb[0].mxu0
    %2228 = vdwg.mxu0
    %2233 = vrot.lane.b32.xlu0 %v2215, 96
    %v2234 = vpop.permute.xlu0 %2233
    %2235 = vrot.lane.b32.xlu0 %v2218, 96
    %v2236 = vpop.permute.xlu0 %2235
    %2237 = vrot.lane.b32.xlu0 %v2223, 96
    %v2238 = vpop.permute.xlu0 %2237
    %2239 = vrot.lane.b32.xlu0 %v2226, 96
    %v2240 = vpop.permute.xlu0 %2239
    %v2245 = vadd.f32 %v2215, %v2234
    %v2246 = vadd.f32 %v2218, %v2236
    %v2247 = vadd.f32 %v2223, %v2238
    %v2248 = vadd.f32 %v2226, %v2240
    %2249 = vmatprep.subr.bf16.mxu0 0
    %2250 = vmatpush1.bf16.msra.mxu0 %v2178
    %2251 = vmatprep.subr.bf16.mxu0 0
    %2252 = vmatpush1.bf16.msra.mxu0 0
    %2253 = vmatprep.subr.bf16.mxu0 0
    %2254 = vmatpush1.bf16.msra.mxu0 0
    %2255 = vmatprep.subr.bf16.mxu0 0
    %2256 = vmatpush1.bf16.msra.mxu0 0
    %2257 = vmatprep.subr.bf16.mxu0 0
    %2258 = vmatpush1.bf16.msra.mxu0 0
    %2259 = vmatprep.subr.bf16.mxu0 0
    %2260 = vmatpush1.bf16.msra.mxu0 0
    %2261 = vmatprep.subr.bf16.mxu0 0
    %2262 = vmatpush1.bf16.msra.mxu0 0
    %2263 = vmatprep.subr.bf16.mxu0 0
    %2264 = vmatpush1.bf16.msra.mxu0 0
    %2265 = vmatprep.subr.bf16.mxu0 0
    %2266 = vmatpush1.bf16.msra.mxu0 0
    %2267 = vmatprep.subr.bf16.mxu0 0
    %2268 = vmatpush1.bf16.msra.mxu0 0
    %2269 = vmatprep.subr.bf16.mxu0 0
    %2270 = vmatpush1.bf16.msra.mxu0 0
    %2271 = vmatprep.subr.bf16.mxu0 0
    %2272 = vmatpush1.bf16.msra.mxu0 0
    %2273 = vmatprep.subr.bf16.mxu0 0
    %2274 = vmatpush1.bf16.msra.mxu0 0
    %2275 = vmatprep.subr.bf16.mxu0 0
    %2276 = vmatpush1.bf16.msra.mxu0 0
    %2277 = vmatprep.subr.bf16.mxu0 0
    %2278 = vmatpush1.bf16.msra.mxu0 0
    %2279 = vmatprep.subr.bf16.mxu0 0
    %2280 = vmatpush1.bf16.msra.mxu0 0
    %2281 = vmatprep.mubr.bf16.mxu0 0
    %2282 = vmatmul.mubr.bf16.gmra.mrb[0].mxu0 %v913
    %v2283 = vpop.f32.mrb[0].mxu0
    %v2284 = vadd.f32 0.0, %v2283
    %v2285 = vpop.f32.mrb[0].mxu0
    %v2286 = vpop.f32.mrb[0].mxu0
    %v2287 = vadd.f32 0.0, %v2286
    %v2288 = vpop.f32.mrb[0].mxu0
    %2289 = vmatprep.mubr.bf16.mxu0 0
    %2290 = vmatmul.mubr.bf16.gmra.mrb[0].mxu0 %v916
    %v2291 = vpop.f32.mrb[0].mxu0
    %v2292 = vadd.f32 0.0, %v2291
    %v2293 = vpop.f32.mrb[0].mxu0
    %v2294 = vpop.f32.mrb[0].mxu0
    %v2295 = vadd.f32 0.0, %v2294
    %v2296 = vpop.f32.mrb[0].mxu0
    %2297 = vdwg.mxu0
    %2302 = vrot.lane.b32.xlu0 %v2284, 96
    %v2303 = vpop.permute.xlu0 %2302
    %2304 = vrot.lane.b32.xlu0 %v2287, 96
    %v2305 = vpop.permute.xlu0 %2304
    %2306 = vrot.lane.b32.xlu0 %v2292, 96
    %v2307 = vpop.permute.xlu0 %2306
    %2308 = vrot.lane.b32.xlu0 %v2295, 96
    %v2309 = vpop.permute.xlu0 %2308
    %v2314 = vadd.f32 %v2284, %v2303
    %v2315 = vadd.f32 %v2287, %v2305
    %v2316 = vadd.f32 %v2292, %v2307
    %v2317 = vadd.f32 %v2295, %v2309
    %2322 = vrot.lane.b32.xlu0 %v2245, 64
    %v2323 = vpop.permute.xlu0 %2322
    %2324 = vrot.lane.b32.xlu0 %v2246, 64
    %v2325 = vpop.permute.xlu0 %2324
    %2326 = vrot.lane.b32.xlu0 %v2247, 64
    %v2327 = vpop.permute.xlu0 %2326
    %2328 = vrot.lane.b32.xlu0 %v2248, 64
    %v2329 = vpop.permute.xlu0 %2328
    %v2334 = vadd.f32 %v2314, %v2323
    %v2335 = vadd.f32 %v2315, %v2325
    %v2336 = vadd.f32 %v2316, %v2327
    %v2337 = vadd.f32 %v2317, %v2329
    %2338 = vrot.lane.b32.xlu0 %v500, 64
    %v2339 = vpop.permute.xlu0 %2338
    %2340 = vrot.lane.b32.xlu0 %v505, 64
    %v2341 = vpop.permute.xlu0 %2340
    %2342 = vrot.lane.b32.xlu0 %v510, 64
    %v2343 = vpop.permute.xlu0 %2342
    %2344 = vrot.lane.b32.xlu0 %v515, 64
    %v2345 = vpop.permute.xlu0 %2344
    %v2350 = vadd.f32 %v2334, %v2339
    %v2351 = vadd.f32 %v2335, %v2341
    %v2352 = vadd.f32 %v2336, %v2343
    %v2353 = vadd.f32 %v2337, %v2345
    %s2354 = scalar_lea.vmem %s16, 2
    %v2355 = vld [vmem:[%s2354] sm:$0x1]
    %v2357 = vlaneseq
    %v2358 = vshrl.u32 %v2357, 7
    %v2359 = vsub.s32 0, %v2358
    %v2360 = vrot.slane %v2355, %v2359
    %v2362 = vadd.f32 %v2350, %v2360
    %v2363 = vadd.f32 %v2351, %v2360
    %v2364 = vadd.f32 %v2352, %v2360
    %v2365 = vadd.f32 %v2353, %v2360
    %vm2366 = vcmp.gt.f32.partialorder %v2362, 0.0
    %vm2367 = vcmp.gt.f32.partialorder %v2363, 0.0
    %vm2368 = vcmp.gt.f32.partialorder %v2364, 0.0
    %vm2369 = vcmp.gt.f32.partialorder %v2365, 0.0
    %v2370 = vmul.f32 %v2362, 0.2
    %v2371 = vmul.f32 %v2363, 0.2
    %v2372 = vmul.f32 %v2364, 0.2
    %v2373 = vmul.f32 %v2365, 0.2
    %v2374 = vsel %vm2366, %v2362, %v2370
    %v2375 = vsel %vm2367, %v2363, %v2371
    %v2376 = vsel %vm2368, %v2364, %v2372
    %v2377 = vsel %vm2369, %v2365, %v2373
    %v2378 = vsel %vm156, %v2374, -inf
    %v2379 = vsel %vm156, %v2375, -inf
    %v2380 = vsel %vm156, %v2376, -inf
    %v2381 = vsel %vm156, %v2377, -inf
    %v2382 = vmax.f32 %v2378, %v2379
    %v2383 = vmax.f32 %v2380, %v2381
    %v2384 = vmax.f32 %v2382, %v2383
    %v2385 = vrot.slane %v2384, 4
    %v2386 = vmax.f32 %v2384, %v2385
    %v2387 = vrot.slane %v2386, 2
    %v2388 = vmax.f32 %v2386, %v2387
    %v2389 = vrot.slane %v2388, 1
    %v2390 = vmax.f32 %v2388, %v2389
    %v2391 = vsub.f32 %v2374, %v2390
    %v2392 = vsub.f32 %v2375, %v2390
    %v2393 = vsub.f32 %v2376, %v2390
    %v2394 = vsub.f32 %v2377, %v2390
    %v2395 = vmul.f32 %v2391, 1.442695
    %v2396 = vpow.pop %v2395
    %v2397 = vmul.f32 %v2392, 1.442695
    %v2398 = vpow.pop %v2397
    %v2399 = vmul.f32 %v2393, 1.442695
    %v2400 = vpow.pop %v2399
    %v2401 = vmul.f32 %v2394, 1.442695
    %v2402 = vpow.pop %v2401
    %v2403 = vmul.f32 %v2245, %v2396
    %v2404 = vmul.f32 %v2246, %v2398
    %v2405 = vmul.f32 %v2247, %v2400
    %v2406 = vmul.f32 %v2248, %v2402
    %v2407 = vpack.c.bf16 %v2398, %v2396
    %v2408 = vpack.c.bf16 %v2402, %v2400
    %v2409 = vunpack.c.l.bf16 %v2407
    %v2410 = vunpack.c.h.bf16 %v2407
    %v2411 = vunpack.c.l.bf16 %v2408
    %v2412 = vunpack.c.h.bf16 %v2408
    %v2413 = vsub.f32 %v2396, %v2409
    %v2414 = vsub.f32 %v2398, %v2410
    %v2415 = vsub.f32 %v2400, %v2411
    %v2416 = vsub.f32 %v2402, %v2412
    %v2417 = vpack.c.bf16 %v2414, %v2413
    %v2418 = vpack.c.bf16 %v2416, %v2415
    %v2419 = vpack.c.bf16 %v2404, %v2403
    %v2420 = vpack.c.bf16 %v2406, %v2405
    %v2421 = vunpack.c.l.bf16 %v2419
    %v2422 = vunpack.c.h.bf16 %v2419
    %v2423 = vunpack.c.l.bf16 %v2420
    %v2424 = vunpack.c.h.bf16 %v2420
    %v2425 = vsub.f32 %v2403, %v2421
    %v2426 = vsub.f32 %v2404, %v2422
    %v2427 = vsub.f32 %v2405, %v2423
    %v2428 = vsub.f32 %v2406, %v2424
    %v2429 = vpack.c.bf16 %v2426, %v2425
    %v2430 = vpack.c.bf16 %v2428, %v2427
    %2433 = vrot.lane.b32.xlu0 %v2417, 32
    %v2434 = vpop.permute.xlu0 %2433
    %2435 = vrot.lane.b32.xlu0 %v2418, 32
    %v2436 = vpop.permute.xlu0 %2435
    %2439 = vrot.lane.b32.xlu0 %v2419, 64
    %v2440 = vpop.permute.xlu0 %2439
    %2441 = vrot.lane.b32.xlu0 %v2420, 64
    %v2442 = vpop.permute.xlu0 %2441
    %2445 = vrot.lane.b32.xlu0 %v2429, 96
    %v2446 = vpop.permute.xlu0 %2445
    %2447 = vrot.lane.b32.xlu0 %v2430, 96
    %v2448 = vpop.permute.xlu0 %2447
    %v2451 = vsel %vm156, %v2407, %v2434
    %v2454 = vsel %vm156, %v2408, %v2436
    %v2456 = vsel %vm418, %v2451, %v2440
    %v2458 = vsel %vm418, %v2454, %v2442
    %v2460 = vsel %vm806, %v2456, %v2446
    %v2463 = vsel %vm806, %v2458, %v2448
    %2465 = vmatprep.subr.bf16.mxu0 0
    %2466 = vmatpush1.bf16.msra.mxu0 %v2460
    %2467 = vmatprep.subr.bf16.mxu0 0
    %2468 = vmatpush1.bf16.msra.mxu0 %v2463
    %2469 = vmatprep.subr.bf16.mxu0 0
    %2470 = vmatpush1.bf16.msra.mxu0 0
    %2471 = vmatprep.subr.bf16.mxu0 0
    %2472 = vmatpush1.bf16.msra.mxu0 0
    %2473 = vmatprep.subr.bf16.mxu0 0
    %2474 = vmatpush1.bf16.msra.mxu0 0
    %2475 = vmatprep.subr.bf16.mxu0 0
    %2476 = vmatpush1.bf16.msra.mxu0 0
    %2477 = vmatprep.subr.bf16.mxu0 0
    %2478 = vmatpush1.bf16.msra.mxu0 0
    %2479 = vmatprep.subr.bf16.mxu0 0
    %2480 = vmatpush1.bf16.msra.mxu0 0
    %2481 = vmatprep.subr.bf16.mxu0 0
    %2482 = vmatpush1.bf16.msra.mxu0 0
    %2483 = vmatprep.subr.bf16.mxu0 0
    %2484 = vmatpush1.bf16.msra.mxu0 0
    %2485 = vmatprep.subr.bf16.mxu0 0
    %2486 = vmatpush1.bf16.msra.mxu0 0
    %2487 = vmatprep.subr.bf16.mxu0 0
    %2488 = vmatpush1.bf16.msra.mxu0 0
    %2489 = vmatprep.subr.bf16.mxu0 0
    %2490 = vmatpush1.bf16.msra.mxu0 0
    %2491 = vmatprep.subr.bf16.mxu0 0
    %2492 = vmatpush1.bf16.msra.mxu0 0
    %2493 = vmatprep.subr.bf16.mxu0 0
    %2494 = vmatpush1.bf16.msra.mxu0 0
    %2495 = vmatprep.subr.bf16.mxu0 0
    %2496 = vmatpush1.bf16.msra.mxu0 0
    %2497 = vmatprep.mubr.bf16.mxu0 0
    %2498 = vmatmul.mubr.bf16.gmra.mrb[0].mxu0 %v1127
    %v2499 = vpop.f32.mrb[0].mxu0
    %v2500 = vadd.f32 0.0, %v2499
    %v2501 = vpop.f32.mrb[0].mxu0
    %v2502 = vpop.f32.mrb[0].mxu0
    %v2503 = vadd.f32 0.0, %v2502
    %v2504 = vpop.f32.mrb[0].mxu0
    %2505 = vdwg.mxu0
    %2508 = vrot.lane.b32.xlu0 %v2500, 96
    %v2509 = vpop.permute.xlu0 %2508
    %2510 = vrot.lane.b32.xlu0 %v2503, 96
    %v2511 = vpop.permute.xlu0 %2510
    %v2514 = vadd.f32 %v2500, %v2509
    %v2515 = vadd.f32 %v2503, %v2511
    %v2516 = vadd.f32 %v2514, 1e-16
    %v2517 = vadd.f32 %v2515, 1e-16
    %v2518 = vrcp.pop %v2516
    %v2519 = vrcp.pop %v2517
    %v2520 = vmul.f32 %v2516, %v2518
    %v2521 = vmul.f32 %v2517, %v2519
    %v2522 = vsub.f32 2.0, %v2520
    %v2523 = vsub.f32 2.0, %v2521
    %v2524 = vmul.f32 %v2518, %v2522
    %v2525 = vmul.f32 %v2519, %v2523
    %2528 = vrot.lane.b32.xlu0 %v2524, 64
    %v2529 = vpop.permute.xlu0 %2528
    %2530 = vrot.lane.b32.xlu0 %v2525, 64
    %v2531 = vpop.permute.xlu0 %2530
    %v2534 = vmul.f32 %v2514, %v2529
    %v2535 = vmul.f32 %v2515, %v2531
    %2538 = vrot.lane.b32.xlu0 %v2534, 64
    %v2539 = vpop.permute.xlu0 %2538
    %2540 = vrot.lane.b32.xlu0 %v2535, 64
    %v2541 = vpop.permute.xlu0 %2540
    %v2544 = vadd.f32 %v1878, %v2539
    %v2545 = vadd.f32 %v1879, %v2541
    %2546 = vst.msk [vmem:[#allocation2] sm:$0xff] %vm156, %v2544
    %2547 = vst.msk [vmem:[#allocation2 + $0x8] sm:$0xff] %vm156, %v2545
    // Predicated region
    $region70: #{tpu_custom_call.1} parent=1 // pred_check
      _
    $region71: #{tpu_custom_call.1} parent=1 // pred_check_branch
      %2549 = sbr.rel (0) target = $region73
    $region72: #{tpu_custom_call.1} parent=1 // pred_region
      %s2551 = ssub.s32 256, 256
      %2552 = vsyncadd [#allocation3], %s2551
      %s2553 = sshll.u32 [#allocation2], 4
      %s2554 = int_to_ptr.vmem [resolvable:$true] %s2553
      %2559 = dma.vmem_to_hbm [thread:$0]  %s2554, 256, %s17, [#allocation3], 128, 128, 8
    $region73: #{tpu_custom_call.1} parent=1 // pred_fallthru
      _
    // Predicated region
    $region74: #{tpu_custom_call.1} parent=1 // pred_check
      _
    $region75: #{tpu_custom_call.1} parent=1 // pred_check_branch
      %2561 = sbr.rel (0) target = $region77
    $region76: #{tpu_custom_call.1} parent=1 // pred_region
      %2562 = dma.done [#allocation3], 256
    $region77: #{tpu_custom_call.1} parent=1 // pred_fallthru
      _
    %2563 = vsyncpa [#allocation3], 1

</llo_original>
